<compile_context>
chip_gen: v7x
topology: tpu7x:2x2x1
jax: 0.10.0
libtpu: 0.0.40
codegen_flags: <defaults>
</compile_context>

<pallas_src>
import functools

import numpy as np
import jax
import jax.numpy as jnp
from jax.experimental import pallas as pl
from jax.experimental.pallas import tpu as pltpu


_VMEM_LIMIT = 64 * 1024 * 1024


# ----------------------------------------------------------------------------
# In-kernel helpers
# ----------------------------------------------------------------------------
def _instance_norm_lrelu(x):
    # InstanceNorm2d (affine=False, eps=1e-5, biased var) + LeakyReLU(0.01); f32 VPU math.
    mean = jnp.mean(x, axis=1, keepdims=True)
    c = x - mean
    var = jnp.mean(c * c, axis=1, keepdims=True)
    y = c * jax.lax.rsqrt(var + 1e-5)
    return jnp.where(y >= 0.0, y, 0.01 * y)


def _build_interp(gx, gy, H_in, W_in, dtype):
    """Bilinear grid_sample (align_corners=False, zeros padding) as a (HWin, T) matrix."""
    hw_in = H_in * W_in
    ix = ((gx + 1.0) * W_in - 1.0) * 0.5
    iy = ((gy + 1.0) * H_in - 1.0) * 0.5
    x0f = jnp.floor(ix)
    y0f = jnp.floor(iy)
    wx1 = ix - x0f
    wx0 = 1.0 - wx1
    wy1 = iy - y0f
    wy0 = 1.0 - wy1
    x0 = x0f.astype(jnp.int32)
    y0 = y0f.astype(jnp.int32)
    vx0 = (x0 >= 0) & (x0 <= W_in - 1)
    vx1 = (x0 >= -1) & (x0 <= W_in - 2)
    vy0 = (y0 >= 0) & (y0 <= H_in - 1)
    vy1 = (y0 >= -1) & (y0 <= H_in - 2)
    w00 = jnp.where(vx0 & vy0, wx0 * wy0, 0.0)
    w01 = jnp.where(vx1 & vy0, wx1 * wy0, 0.0)
    w10 = jnp.where(vx0 & vy1, wx0 * wy1, 0.0)
    w11 = jnp.where(vx1 & vy1, wx1 * wy1, 0.0)
    idx00 = y0 * W_in + x0                                  # unclipped base index
    T = gx.shape[-1]
    d = jax.lax.broadcasted_iota(jnp.int32, (hw_in, T), 0) - idx00
    interp = (jnp.where(d == 0, w00, 0.0)
              + jnp.where(d == 1, w01, 0.0)
              + jnp.where(d == W_in, w10, 0.0)
              + jnp.where(d == W_in + 1, w11, 0.0))
    return interp.astype(dtype)


def _pick_tile(hw, cap=1024):
    for t in (1024, 512, 256, 128):
        if t <= cap and hw % t == 0:
            return t
    # TODO(synk): pad HW to a multiple of 128 instead of a full-extent fallback.
    return hw


# ----------------------------------------------------------------------------
# Kernel 1: bilinear warp (grid_sample), output tiled along HWout, bf16 output
# ----------------------------------------------------------------------------
def _warp_kernel(x_ref, gx_ref, gy_ref, o_ref, *, H_in, W_in):
    interp = _build_interp(gx_ref[0], gy_ref[0], H_in, W_in, jnp.bfloat16)
    y = jnp.dot(x_ref[0].astype(jnp.bfloat16), interp,
                preferred_element_type=jnp.float32)
    o_ref[0] = y.astype(jnp.bfloat16)


def grid_sample_flat(x_flat, gx, gy, h_in, w_in):
    # x_flat: (N, C, HWin) f32, gx/gy: (N, 1, HWout) -> (N, C, HWout) bf16
    n, c, hw_in = x_flat.shape
    hw_out = gx.shape[-1]
    t = _pick_tile(hw_out, cap=1024)
    return pl.pallas_call(
        functools.partial(_warp_kernel, H_in=h_in, W_in=w_in),
        out_shape=jax.ShapeDtypeStruct((n, c, hw_out), jnp.bfloat16),
        grid=(n, hw_out // t),
        in_specs=[
            pl.BlockSpec((1, c, hw_in), lambda i, j: (i, 0, 0)),
            pl.BlockSpec((1, 1, t), lambda i, j: (i, 0, j)),
            pl.BlockSpec((1, 1, t), lambda i, j: (i, 0, j)),
        ],
        out_specs=pl.BlockSpec((1, c, t), lambda i, j: (i, 0, j)),
        compiler_params=pltpu.CompilerParams(
            dimension_semantics=("parallel", "parallel"),
            vmem_limit_bytes=_VMEM_LIMIT),
    )(x_flat, gx, gy)


# ----------------------------------------------------------------------------
# Kernel 2: fully fused ArbitraryOffset network.
#   Each 3x3 conv = 9 shifted matmuls (roll + edge mask) accumulated in f32,
#   so there is NO im2col scratch; intermediates live in VMEM values only.
# ----------------------------------------------------------------------------
def _offset_net_kernel(em_ref, nm_ref, ego_ref, nbr_ref,
                       w1_ref, b1_ref, w2_ref, b2_ref,
                       w3_ref, b3_ref, w4_ref, b4_ref,
                       o_ref, *, H, W):
    del em_ref, nm_ref  # only used by the index_maps
    HW = H * W
    lane = jax.lax.broadcasted_iota(jnp.int32, (1, HW), 1)
    wpos = lane % W
    hpos = lane // W

    def conv3x3(x_bf16, w_ref):
        # x_bf16: (cin, HW) bf16; w_ref: (9, cout, cin) bf16 -> (cout, HW) f32
        cout = w_ref.shape[1]
        # pre-mask the W-edge wrap of each horizontal tap (source-coordinate mask)
        x_dw = (jnp.where(wpos == W - 1, 0.0, x_bf16),   # dw = 0 reads x[.., w-1]
                x_bf16,                                   # dw = 1
                jnp.where(wpos == 0, 0.0, x_bf16))        # dw = 2 reads x[.., w+1]
        acc = jnp.zeros((cout, HW), jnp.float32)
        for dh in range(3):
            for dw in range(3):
                off = (dh - 1) * W + (dw - 1)            # source lane offset of tap
                v = x_dw[dw]
                if off != 0:
                    # shifted[:, i] = x[:, i + off]  (XLU lane rotation, static shift)
                    v = pltpu.roll(v, shift=(-off) % HW, axis=1)
                if dh == 0:                               # H-edge zero padding
                    v = jnp.where(hpos == 0, 0.0, v)
                elif dh == 2:
                    v = jnp.where(hpos == H - 1, 0.0, v)
                acc = acc + jnp.dot(w_ref[dh * 3 + dw], v,
                                    preferred_element_type=jnp.float32)
        return acc

    # concat([ego, neighbor]) along channels, kept in bf16 (warped features are bf16)
    x = jnp.concatenate([ego_ref[0], nbr_ref[0]], axis=0)          # (2C, HW) bf16
    h1 = _instance_norm_lrelu(conv3x3(x, w1_ref) + b1_ref[...])
    h2 = _instance_norm_lrelu(conv3x3(h1.astype(jnp.bfloat16), w2_ref) + b2_ref[...])
    h3 = _instance_norm_lrelu(
        jnp.dot(w3_ref[...], h2.astype(jnp.bfloat16),
                preferred_element_type=jnp.float32) + b3_ref[...])
    y = jnp.dot(w4_ref[...], h3.astype(jnp.bfloat16),
                preferred_element_type=jnp.float32) + b4_ref[...]
    o_ref[0] = y


def offset_net_forward(x0_warp_flat, ego_map, nb_map, params, C, H, W):
    # x0_warp_flat: (sum_cav, C, HW) bf16; ego_map/nb_map: (n_pairs,) int32
    # -> (n_pairs, 2, HW) f32
    n_pairs = ego_map.shape[0]
    HW = H * W
    HID = params["w1"].shape[0]
    # (Cout, Cin, 3, 3) -> (9, Cout, Cin), tap index k = dh*3 + dw
    w1t = jnp.transpose(params["w1"], (2, 3, 0, 1)).reshape(9, HID, 2 * C).astype(jnp.bfloat16)
    w2t = jnp.transpose(params["w2"], (2, 3, 0, 1)).reshape(9, HID // 2, HID).astype(jnp.bfloat16)
    w3f = params["w3"].reshape(HID // 4, HID // 2).astype(jnp.bfloat16)
    w4f = params["w4"].reshape(2, HID // 4).astype(jnp.bfloat16)
    b1 = params["b1"].reshape(HID, 1).astype(jnp.float32)
    b2 = params["b2"].reshape(HID // 2, 1).astype(jnp.float32)
    b3 = params["b3"].reshape(HID // 4, 1).astype(jnp.float32)
    b4 = params["b4"].reshape(2, 1).astype(jnp.float32)

    # TODO(synk): on v7x (2 TCs) a single small 'parallel' pairs axis can leave one
    # core idle; batching pairs / adding an HW-tile axis would balance it.
    grid_spec = pltpu.PrefetchScalarGridSpec(
        num_scalar_prefetch=2,
        grid=(n_pairs,),
        in_specs=[
            pl.BlockSpec((1, C, HW), lambda i, em, nm: (em[i], 0, 0)),
            pl.BlockSpec((1, C, HW), lambda i, em, nm: (nm[i], 0, 0)),
            pl.BlockSpec((9, HID, 2 * C), lambda i, em, nm: (0, 0, 0)),
            pl.BlockSpec((HID, 1), lambda i, em, nm: (0, 0)),
            pl.BlockSpec((9, HID // 2, HID), lambda i, em, nm: (0, 0, 0)),
            pl.BlockSpec((HID // 2, 1), lambda i, em, nm: (0, 0)),
            pl.BlockSpec((HID // 4, HID // 2), lambda i, em, nm: (0, 0)),
            pl.BlockSpec((HID // 4, 1), lambda i, em, nm: (0, 0)),
            pl.BlockSpec((2, HID // 4), lambda i, em, nm: (0, 0)),
            pl.BlockSpec((2, 1), lambda i, em, nm: (0, 0)),
        ],
        out_specs=pl.BlockSpec((1, 2, HW), lambda i, em, nm: (i, 0, 0)),
    )
    return pl.pallas_call(
        functools.partial(_offset_net_kernel, H=H, W=W),
        out_shape=jax.ShapeDtypeStruct((n_pairs, 2, HW), jnp.float32),
        grid_spec=grid_spec,
        compiler_params=pltpu.CompilerParams(
            dimension_semantics=("parallel",),
            vmem_limit_bytes=_VMEM_LIMIT),
    )(ego_map, nb_map, x0_warp_flat, x0_warp_flat,
      w1f_or(w1t), b1, w2t, b2, w3f, b3, w4f, b4)


def w1f_or(w):  # small identity helper kept to keep the call-site compact
    return w


# ----------------------------------------------------------------------------
# Kernel 3: fused deformable sampling of the neighbors + max fusion with ego.
#   grid = (batch, agent, hw_tile): hw-tile innermost so each neighbor's full
#   (c, hw) block is DMA'd once per agent; the output block index is constant
#   over (agent, tile), so the max is accumulated directly into o_ref in VMEM.
# ----------------------------------------------------------------------------
def _deform_max_kernel(ei_ref, nc_ref, pb_ref,
                       ego_ref, x_ref, gx_ref, gy_ref, o_ref, *, H_in, W_in, T):
    del ei_ref, pb_ref
    b = pl.program_id(0)
    a = pl.program_id(1)
    j = pl.program_id(2)
    sl = pl.ds(pl.multiple_of(j * T, T), T)

    @pl.when(a == 0)
    def _():
        o_ref[0, :, sl] = ego_ref[0].astype(jnp.float32)

    @pl.when(a < nc_ref[b])
    def _():
        interp = _build_interp(gx_ref[0], gy_ref[0], H_in, W_in, jnp.bfloat16)
        s = jnp.dot(x_ref[0], interp, preferred_element_type=jnp.float32)
        o_ref[0, :, sl] = jnp.maximum(o_ref[0, :, sl], s)


def deform_sample_max(x_warp_flat, gx, gy, ego_idx, nbc, pbase, h_in, w_in, n_max_m1):
    # x_warp_flat: (sum_cav, C, HW) bf16; gx/gy: (n_pairs, 1, HW) -> fused (B, C, HW) f32
    sum_cav, c, hw = x_warp_flat.shape
    n_pairs = gx.shape[0]
    B = ego_idx.shape[0]
    t = _pick_tile(hw, cap=512)   # keep per-step interp / ds slices modest (v7x VMEM)

    def ego_idx_map(b, a, j, ei, nc, pb):
        # ego tile only needed at a == 0; keep the block index constant afterwards
        # so it is not re-fetched for every (a, j).
        return (ei[b], 0, jnp.where(a == 0, j, 0))

    def nbr_idx_map(b, a, j, ei, nc, pb):
        local = jnp.minimum(a, jnp.maximum(nc[b] - 1, 0))
        return (jnp.minimum(ei[b] + 1 + local, sum_cav - 1), 0, 0)

    def grid_idx_map(b, a, j, ei, nc, pb):
        local = jnp.minimum(a, jnp.maximum(nc[b] - 1, 0))
        return (jnp.minimum(pb[b] + local, n_pairs - 1), 0, j)

    grid_spec = pltpu.PrefetchScalarGridSpec(
        num_scalar_prefetch=3,
        grid=(B, n_max_m1, hw // t),
        in_specs=[
            pl.BlockSpec((1, c, t), ego_idx_map),
            pl.BlockSpec((1, c, hw), nbr_idx_map),      # fetched once per (b, agent)
            pl.BlockSpec((1, 1, t), grid_idx_map),
            pl.BlockSpec((1, 1, t), grid_idx_map),
        ],
        # full-HW output block, index constant across (agent, tile) -> stays resident
        # in VMEM and acts as the max accumulator (written back once per batch).
        out_specs=pl.BlockSpec((1, c, hw), lambda b, a, j, ei, nc, pb: (b, 0, 0)),
    )
    return pl.pallas_call(
        functools.partial(_deform_max_kernel, H_in=h_in, W_in=w_in, T=t),
        out_shape=jax.ShapeDtypeStruct((B, c, hw), jnp.float32),
        grid_spec=grid_spec,
        compiler_params=pltpu.CompilerParams(
            dimension_semantics=("parallel", "arbitrary", "arbitrary"),
            vmem_limit_bytes=_VMEM_LIMIT),
    )(ego_idx, nbc, pbase, x_warp_flat, x_warp_flat, gx, gy)


# ----------------------------------------------------------------------------
# Plain-JAX glue: affine grids, params, DeformFusion forward
# ----------------------------------------------------------------------------
def _base_grid(h, w):
    # F.affine_grid base grid with align_corners=False, last dim = (x, y)
    xs = (2.0 * jnp.arange(w, dtype=jnp.float32) + 1.0) / w - 1.0
    ys = (2.0 * jnp.arange(h, dtype=jnp.float32) + 1.0) / h - 1.0
    gx = jnp.broadcast_to(xs[None, :], (h, w))
    gy = jnp.broadcast_to(ys[:, None], (h, w))
    return jnp.stack([gx, gy], axis=-1)


def _affine_grid(M, h, w):
    # M: (N, 2, 3) normalized affine -> grid (N, H, W, 2)
    base = _base_grid(h, w)
    base3 = jnp.concatenate([base, jnp.ones((h, w, 1), jnp.float32)], axis=-1)
    return jnp.einsum("nij,hwj->nhwi", M.astype(jnp.float32), base3)


def init_arbitrary_offset_params(key, in_ch, hidden_ch=32):
    ks = jax.random.split(key, 8)

    def conv_w(k, co, ci, kh, kw):
        bound = 1.0 / np.sqrt(ci * kh * kw)
        return jax.random.uniform(k, (co, ci, kh, kw), jnp.float32, -bound, bound)

    def conv_b(k, co, fan_in):
        bound = 1.0 / np.sqrt(fan_in)
        return jax.random.uniform(k, (co,), jnp.float32, -bound, bound)

    return {
        "w1": conv_w(ks[0], hidden_ch, in_ch, 3, 3),
        "b1": conv_b(ks[1], hidden_ch, in_ch * 9),
        "w2": conv_w(ks[2], hidden_ch // 2, hidden_ch, 3, 3),
        "b2": conv_b(ks[3], hidden_ch // 2, hidden_ch * 9),
        "w3": conv_w(ks[4], hidden_ch // 4, hidden_ch // 2, 1, 1),
        "b3": conv_b(ks[5], hidden_ch // 4, hidden_ch // 2),
        "w4": conv_w(ks[6], 2, hidden_ch // 4, 1, 1),
        "b4": conv_b(ks[7], 2, hidden_ch // 4),
    }


def deform_fusion_forward(features, record_len, pairwise_t_matrix, params):
    # record_len is static host-side metadata (it determines array shapes).
    record_len = [int(r) for r in record_len]
    nbc_list = [r - 1 for r in record_len]
    n_pairs = sum(nbc_list)
    if n_pairs == 0:
        return features

    B = len(record_len)
    sum_cav = sum(record_len)
    starts = [0]
    for r in record_len[:-1]:
        starts.append(starts[-1] + r)
    pbase_list = [0]
    for r in nbc_list[:-1]:
        pbase_list.append(pbase_list[-1] + r)

    ego_idx = jnp.asarray(starts, jnp.int32)
    nbc = jnp.asarray(nbc_list, jnp.int32)
    pbase = jnp.asarray(pbase_list, jnp.int32)

    ego_map_l, nb_map_l = [], []
    for b in range(B):
        for j in range(nbc_list[b]):
            ego_map_l.append(starts[b])
            nb_map_l.append(starts[b] + 1 + j)
    ego_map = jnp.asarray(ego_map_l, jnp.int32)
    nb_map = jnp.asarray(nb_map_l, jnp.int32)

    # Warp every agent into its batch's ego (agent 0) frame, one pallas_call per scale.
    # TODO(synk): follows F.affine_grid/F.grid_sample defaults (align_corners=False);
    # some opencood versions use align_corners=True in warp_affine_simple.
    t_all = jnp.concatenate(
        [pairwise_t_matrix[b, 0, :record_len[b]] for b in range(B)], axis=0)  # (sum_cav, 2, 3)

    warped_flat, shapes = [], []
    for f in features:
        _, c, h, w = f.shape
        g = _affine_grid(t_all, h, w)                           # (sum_cav, h, w, 2)
        gx = g[..., 0].reshape(sum_cav, 1, h * w)
        gy = g[..., 1].reshape(sum_cav, 1, h * w)
        wf = grid_sample_flat(f.reshape(sum_cav, c, h * w).astype(jnp.float32), gx, gy, h, w)
        warped_flat.append(wf)                                  # bf16
        shapes.append((c, h, w))

    # Fused ArbitraryOffset network on (ego, neighbor) pairs of the scale-0 warped features.
    c0, h0, w0 = shapes[0]
    y = offset_net_forward(warped_flat[0], ego_map, nb_map, params, c0, h0, w0)
    # NOTE: reproduces the original's raw .reshape(N, H, W, 2) on an NCHW tensor exactly.
    grid_res = y.reshape(n_pairs, h0, w0, 2)
    grid_full = grid_res + _base_grid(h0, w0)[None]             # + identity affine grid

    # Fused deformable sampling + max fusion, one pallas_call per scale.
    n_max_m1 = max(nbc_list)
    outs = []
    for s, (c, h, w) in enumerate(shapes):
        g_s = grid_full[:, ::2 ** s, ::2 ** s, :]
        hw = h * w
        gx = g_s[..., 0].reshape(n_pairs, 1, hw)
        gy = g_s[..., 1].reshape(n_pairs, 1, hw)
        fused = deform_sample_max(warped_flat[s], gx, gy, ego_idx, nbc, pbase, h, w, n_max_m1)
        outs.append(fused.reshape(B, c, h, w))
    # TODO(synk): cycle-consistency branch (cycle_consist_loss=True) and RigidOffset
    # are not implemented (not part of this forward configuration).
    return outs


# ----------------------------------------------------------------------------
# Example run
# ----------------------------------------------------------------------------
if __name__ == "__main__":
    key = jax.random.PRNGKey(0)
    k_f0, k_f1, k_p = jax.random.split(key, 3)

    record_len = [2, 3]                     # 2 batches: 2 cavs and 3 cavs
    sum_cav = sum(record_len)
    C, H, W = 4, 16, 16

    features = [
        jax.random.normal(k_f0, (sum_cav, C, H, W), jnp.float32),
        jax.random.normal(k_f1, (sum_cav, 2 * C, H // 2, W // 2), jnp.float32),
    ]

    n_max = max(record_len)
    pm = np.zeros((len(record_len), n_max, n_max, 2, 3), np.float32)
    pm[..., 0, 0] = 1.0
    pm[..., 1, 1] = 1.0

    def small_affine(tx, ty, th):
        c, s = np.cos(th), np.sin(th)
        return np.array([[c, s, tx], [-s, c, ty]], np.float32)

    pm[0, 0, 1] = small_affine(0.10, -0.05, 0.05)
    pm[1, 0, 1] = small_affine(-0.08, 0.06, -0.04)
    pm[1, 0, 2] = small_affine(0.05, 0.10, 0.08)
    pairwise_t_matrix = jnp.asarray(pm)

    params = init_arbitrary_offset_params(k_p, in_ch=2 * C, hidden_ch=32)

    outs = deform_fusion_forward(features, record_len, pairwise_t_matrix, params)
    outs = jax.block_until_ready(outs)

    assert outs[0].shape == (len(record_len), C, H, W)
    assert outs[1].shape == (len(record_len), 2 * C, H // 2, W // 2)
    assert all(bool(jnp.all(jnp.isfinite(o))) for o in outs)
    print("KERNEL_OK")
</pallas_src>

<mosaic_0001>
module attributes {stable_mosaic.version = 11 : i64} {
  func.func @_warp_kernel(%arg0: i32, %arg1: i32, %arg2: memref<1x4x256xf32, #tpu.memory_space<vmem>>, %arg3: memref<1x1x256xf32, #tpu.memory_space<vmem>>, %arg4: memref<1x1x256xf32, #tpu.memory_space<vmem>>, %arg5: memref<1x4x256xbf16, #tpu.memory_space<vmem>>) attributes {dimension_semantics = [#tpu.dimension_semantics<parallel>, #tpu.dimension_semantics<parallel>], iteration_bounds = array<i64: 5, 1>, scalar_prefetch = 0 : i64, scratch_operands = 0 : i64, tpu.core_type = #tpu.core_type<tc>, window_params = [{transform_indices = @transform_0, window_bounds = array<i64: 1, 4, 256>}, {transform_indices = @transform_1, window_bounds = array<i64: 1, 1, 256>}, {transform_indices = @transform_2, window_bounds = array<i64: 1, 1, 256>}, {transform_indices = @transform_3, window_bounds = array<i64: 1, 4, 256>}]} {
    %c0 = arith.constant 0 : index
    %c0_0 = arith.constant 0 : index
    %c0_1 = arith.constant 0 : index
    %0 = vector.load %arg3[%c0, %c0_0, %c0_1] : memref<1x1x256xf32, #tpu.memory_space<vmem>>, vector<1x1x256xf32>
    %1 = vector.shape_cast %0 : vector<1x1x256xf32> to vector<1x256xf32>
    %c0_2 = arith.constant 0 : index
    %c0_3 = arith.constant 0 : index
    %c0_4 = arith.constant 0 : index
    %2 = vector.load %arg4[%c0_2, %c0_3, %c0_4] : memref<1x1x256xf32, #tpu.memory_space<vmem>>, vector<1x1x256xf32>
    %3 = vector.shape_cast %2 : vector<1x1x256xf32> to vector<1x256xf32>
    %cst = arith.constant 1.000000e+00 : f32
    %4 = vector.broadcast %cst : f32 to vector<1x256xf32>
    %5 = arith.addf %1, %4 : vector<1x256xf32>
    %cst_5 = arith.constant 1.600000e+01 : f32
    %6 = vector.broadcast %cst_5 : f32 to vector<1x256xf32>
    %7 = arith.mulf %5, %6 : vector<1x256xf32>
    %cst_6 = arith.constant 1.000000e+00 : f32
    %8 = vector.broadcast %cst_6 : f32 to vector<1x256xf32>
    %9 = arith.subf %7, %8 : vector<1x256xf32>
    %cst_7 = arith.constant 5.000000e-01 : f32
    %10 = vector.broadcast %cst_7 : f32 to vector<1x256xf32>
    %11 = arith.mulf %9, %10 : vector<1x256xf32>
    %cst_8 = arith.constant 1.000000e+00 : f32
    %12 = vector.broadcast %cst_8 : f32 to vector<1x256xf32>
    %13 = arith.addf %3, %12 : vector<1x256xf32>
    %cst_9 = arith.constant 1.600000e+01 : f32
    %14 = vector.broadcast %cst_9 : f32 to vector<1x256xf32>
    %15 = arith.mulf %13, %14 : vector<1x256xf32>
    %cst_10 = arith.constant 1.000000e+00 : f32
    %16 = vector.broadcast %cst_10 : f32 to vector<1x256xf32>
    %17 = arith.subf %15, %16 : vector<1x256xf32>
    %cst_11 = arith.constant 5.000000e-01 : f32
    %18 = vector.broadcast %cst_11 : f32 to vector<1x256xf32>
    %19 = arith.mulf %17, %18 : vector<1x256xf32>
    %20 = math.floor %11 : vector<1x256xf32>
    %21 = math.floor %19 : vector<1x256xf32>
    %22 = arith.subf %11, %20 : vector<1x256xf32>
    %cst_12 = arith.constant 1.000000e+00 : f32
    %23 = vector.broadcast %cst_12 : f32 to vector<1x256xf32>
    %24 = arith.subf %23, %22 : vector<1x256xf32>
    %25 = arith.subf %19, %21 : vector<1x256xf32>
    %cst_13 = arith.constant 1.000000e+00 : f32
    %26 = vector.broadcast %cst_13 : f32 to vector<1x256xf32>
    %27 = arith.subf %26, %25 : vector<1x256xf32>
    %28 = arith.fptosi %20 : vector<1x256xf32> to vector<1x256xi32>
    %29 = arith.fptosi %21 : vector<1x256xf32> to vector<1x256xi32>
    %c0_i32 = arith.constant 0 : i32
    %30 = vector.broadcast %c0_i32 : i32 to vector<1x256xi32>
    %31 = arith.cmpi sge, %28, %30 : vector<1x256xi32>
    %c15_i32 = arith.constant 15 : i32
    %32 = vector.broadcast %c15_i32 : i32 to vector<1x256xi32>
    %33 = arith.cmpi sle, %28, %32 : vector<1x256xi32>
    %34 = arith.andi %31, %33 : vector<1x256xi1>
    %c-1_i32 = arith.constant -1 : i32
    %35 = vector.broadcast %c-1_i32 : i32 to vector<1x256xi32>
    %36 = arith.cmpi sge, %28, %35 : vector<1x256xi32>
    %c14_i32 = arith.constant 14 : i32
    %37 = vector.broadcast %c14_i32 : i32 to vector<1x256xi32>
    %38 = arith.cmpi sle, %28, %37 : vector<1x256xi32>
    %39 = arith.andi %36, %38 : vector<1x256xi1>
    %c0_i32_14 = arith.constant 0 : i32
    %40 = vector.broadcast %c0_i32_14 : i32 to vector<1x256xi32>
    %41 = arith.cmpi sge, %29, %40 : vector<1x256xi32>
    %c15_i32_15 = arith.constant 15 : i32
    %42 = vector.broadcast %c15_i32_15 : i32 to vector<1x256xi32>
    %43 = arith.cmpi sle, %29, %42 : vector<1x256xi32>
    %44 = arith.andi %41, %43 : vector<1x256xi1>
    %c-1_i32_16 = arith.constant -1 : i32
    %45 = vector.broadcast %c-1_i32_16 : i32 to vector<1x256xi32>
    %46 = arith.cmpi sge, %29, %45 : vector<1x256xi32>
    %c14_i32_17 = arith.constant 14 : i32
    %47 = vector.broadcast %c14_i32_17 : i32 to vector<1x256xi32>
    %48 = arith.cmpi sle, %29, %47 : vector<1x256xi32>
    %49 = arith.andi %46, %48 : vector<1x256xi1>
    %50 = arith.andi %34, %44 : vector<1x256xi1>
    %51 = arith.mulf %24, %27 : vector<1x256xf32>
    %cst_18 = arith.constant 0.000000e+00 : f32
    %52 = vector.broadcast %cst_18 : f32 to vector<1x256xf32>
    %53 = arith.select %50, %51, %52 : vector<1x256xi1>, vector<1x256xf32>
    %54 = arith.andi %39, %44 : vector<1x256xi1>
    %55 = arith.mulf %22, %27 : vector<1x256xf32>
    %cst_19 = arith.constant 0.000000e+00 : f32
    %56 = vector.broadcast %cst_19 : f32 to vector<1x256xf32>
    %57 = arith.select %54, %55, %56 : vector<1x256xi1>, vector<1x256xf32>
    %58 = arith.andi %34, %49 : vector<1x256xi1>
    %59 = arith.mulf %24, %25 : vector<1x256xf32>
    %cst_20 = arith.constant 0.000000e+00 : f32
    %60 = vector.broadcast %cst_20 : f32 to vector<1x256xf32>
    %61 = arith.select %58, %59, %60 : vector<1x256xi1>, vector<1x256xf32>
    %62 = arith.andi %39, %49 : vector<1x256xi1>
    %63 = arith.mulf %22, %25 : vector<1x256xf32>
    %cst_21 = arith.constant 0.000000e+00 : f32
    %64 = vector.broadcast %cst_21 : f32 to vector<1x256xf32>
    %65 = arith.select %62, %63, %64 : vector<1x256xi1>, vector<1x256xf32>
    %c16_i32 = arith.constant 16 : i32
    %66 = vector.broadcast %c16_i32 : i32 to vector<1x256xi32>
    %67 = arith.muli %29, %66 : vector<1x256xi32>
    %68 = arith.addi %67, %28 : vector<1x256xi32>
    %69 = tpu.iota {dimensions = array<i32: 0>} : vector<256x256xi32>
    %70 = vector.broadcast %68 : vector<1x256xi32> to vector<256x256xi32>
    %71 = arith.subi %69, %70 : vector<256x256xi32>
    %c0_i32_22 = arith.constant 0 : i32
    %72 = vector.broadcast %c0_i32_22 : i32 to vector<256x256xi32>
    %73 = arith.cmpi eq, %71, %72 : vector<256x256xi32>
    %cst_23 = arith.constant 0.000000e+00 : f32
    %74 = vector.shape_cast %53 : vector<1x256xf32> to vector<1x256xf32>
    %75 = vector.broadcast %74 : vector<1x256xf32> to vector<256x256xf32>
    %76 = vector.broadcast %cst_23 : f32 to vector<256x256xf32>
    %77 = arith.select %73, %75, %76 : vector<256x256xi1>, vector<256x256xf32>
    %c1_i32 = arith.constant 1 : i32
    %78 = vector.broadcast %c1_i32 : i32 to vector<256x256xi32>
    %79 = arith.cmpi eq, %71, %78 : vector<256x256xi32>
    %cst_24 = arith.constant 0.000000e+00 : f32
    %80 = vector.shape_cast %57 : vector<1x256xf32> to vector<1x256xf32>
    %81 = vector.broadcast %80 : vector<1x256xf32> to vector<256x256xf32>
    %82 = vector.broadcast %cst_24 : f32 to vector<256x256xf32>
    %83 = arith.select %79, %81, %82 : vector<256x256xi1>, vector<256x256xf32>
    %84 = arith.addf %77, %83 : vector<256x256xf32>
    %c16_i32_25 = arith.constant 16 : i32
    %85 = vector.broadcast %c16_i32_25 : i32 to vector<256x256xi32>
    %86 = arith.cmpi eq, %71, %85 : vector<256x256xi32>
    %cst_26 = arith.constant 0.000000e+00 : f32
    %87 = vector.shape_cast %61 : vector<1x256xf32> to vector<1x256xf32>
    %88 = vector.broadcast %87 : vector<1x256xf32> to vector<256x256xf32>
    %89 = vector.broadcast %cst_26 : f32 to vector<256x256xf32>
    %90 = arith.select %86, %88, %89 : vector<256x256xi1>, vector<256x256xf32>
    %91 = arith.addf %84, %90 : vector<256x256xf32>
    %c17_i32 = arith.constant 17 : i32
    %92 = vector.broadcast %c17_i32 : i32 to vector<256x256xi32>
    %93 = arith.cmpi eq, %71, %92 : vector<256x256xi32>
    %cst_27 = arith.constant 0.000000e+00 : f32
    %94 = vector.shape_cast %65 : vector<1x256xf32> to vector<1x256xf32>
    %95 = vector.broadcast %94 : vector<1x256xf32> to vector<256x256xf32>
    %96 = vector.broadcast %cst_27 : f32 to vector<256x256xf32>
    %97 = arith.select %93, %95, %96 : vector<256x256xi1>, vector<256x256xf32>
    %98 = arith.addf %91, %97 : vector<256x256xf32>
    %99 = arith.truncf %98 : vector<256x256xf32> to vector<256x256xbf16>
    %c0_28 = arith.constant 0 : index
    %c0_29 = arith.constant 0 : index
    %c0_30 = arith.constant 0 : index
    %100 = vector.load %arg2[%c0_28, %c0_29, %c0_30] : memref<1x4x256xf32, #tpu.memory_space<vmem>>, vector<1x4x256xf32>
    %101 = vector.shape_cast %100 : vector<1x4x256xf32> to vector<4x256xf32>
    %102 = arith.truncf %101 : vector<4x256xf32> to vector<4x256xbf16>
    %cst_31 = arith.constant dense<0.000000e+00> : vector<4x256xf32>
    %103 = tpu.matmul %102, %99, %cst_31 {dimension_numbers = #tpu.dot_dimension_numbers<[1], [0], [0], [1], [0, 0, 1, 1], [], []>} : vector<4x256xbf16>, vector<256x256xbf16>, vector<4x256xf32> -> vector<4x256xf32>
    %104 = arith.truncf %103 : vector<4x256xf32> to vector<4x256xbf16>
    %c0_32 = arith.constant 0 : index
    %c0_33 = arith.constant 0 : index
    %c0_34 = arith.constant 0 : index
    %105 = vector.load %arg5[%c0_32, %c0_33, %c0_34] : memref<1x4x256xbf16, #tpu.memory_space<vmem>>, vector<1x4x256xbf16>
    %106 = vector.shape_cast %105 : vector<1x4x256xbf16> to vector<4x256xbf16>
    %107 = vector.shape_cast %104 : vector<4x256xbf16> to vector<1x4x256xbf16>
    tpu.vector_store %arg5[%c0_32, %c0_33, %c0_34], %107 {strides = array<i32>} : memref<1x4x256xbf16, #tpu.memory_space<vmem>>, vector<1x4x256xbf16>,
    return
  }
  func.func @transform_0(%arg0: i32, %arg1: i32) -> (i32, i32, i32) {
    %c0_i32 = arith.constant 0 : i32
    %c0_i32_0 = arith.constant 0 : i32
    %c0_i32_1 = arith.constant 0 : i32
    return %arg0, %c0_i32, %c0_i32_0 : i32, i32, i32
  }
  func.func @transform_1(%arg0: i32, %arg1: i32) -> (i32, i32, i32) {
    %c0_i32 = arith.constant 0 : i32
    %c0_i32_0 = arith.constant 0 : i32
    return %arg0, %c0_i32, %arg1 : i32, i32, i32
  }
  func.func @transform_2(%arg0: i32, %arg1: i32) -> (i32, i32, i32) {
    %c0_i32 = arith.constant 0 : i32
    %c0_i32_0 = arith.constant 0 : i32
    return %arg0, %c0_i32, %arg1 : i32, i32, i32
  }
  func.func @transform_3(%arg0: i32, %arg1: i32) -> (i32, i32, i32) {
    %c0_i32 = arith.constant 0 : i32
    %c0_i32_0 = arith.constant 0 : i32
    return %arg0, %c0_i32, %arg1 : i32, i32, i32
  }
}

</mosaic_0001>

<llo_original>
// kernel: tpu_custom_call.1
$region0: #{tpu_custom_call.1}
  #allocation0 [shape = 'u32[]', space=smem, size = 0x4, offset = 0x4, fixed_abs, tag = 'smem constant byte address 0x4 - core index']
  #allocation1 [shape = 'u32[144,128]{1,0:T(1,128)}', space=vmem, size = 0x12000, scoped, tag = 'internal scratch']
  %s0 = inlined_call_operand.hbm [shape: f32[5,4,256], index: 0, kind: input, shape index: {}]
  %s1 = inlined_call_operand.hbm [shape: f32[5,1,256], index: 1, kind: input, shape index: {}]
  %s2 = inlined_call_operand.hbm [shape: f32[5,1,256], index: 2, kind: input, shape index: {}]
  %s3 = inlined_call_operand.hbm [shape: bf16[5,4,256], index: 3, kind: output, shape index: {}]
  %s4 = sld [smem:[#allocation0]]
  $region57: #{tpu_custom_call.1} parent=0
    _
  %s6 = ssub.s32 1, %s4
  %s7 = scalar_select 0, %s6, %s4
  $region1: #{tpu_custom_call.1} parent=0
    #allocation2 [shape = 'u8[8192]{0}', space=vmem, size = 0x2000, scoped, tag = 'input window, operand 0']
    #allocation3 [shape = 's32[2]{0}', space=sflag, size = 0x8, scoped, tag = 'scoped memory for tpu_custom_call.1']
    #allocation4 [shape = 's32[2]{0}', space=sflag, size = 0x8, scoped, tag = 'scoped memory for tpu_custom_call.1']
    #allocation5 [shape = 'u8[2048]{0}', space=vmem, size = 0x800, scoped, tag = 'input window, operand 1']
    #allocation6 [shape = 's32[2]{0}', space=sflag, size = 0x8, scoped, tag = 'scoped memory for tpu_custom_call.1']
    #allocation7 [shape = 'u8[2048]{0}', space=vmem, size = 0x800, scoped, tag = 'input window, operand 2']
    #allocation8 [shape = 'u8[4096]{0}', space=vmem, size = 0x1000, scoped, tag = 'output window, operand 0']
    %8 = vsyncpa [#allocation3], 0
    %s9 = scalar_lea.sflag [#allocation3], 1
    %10 = vsyncpa %s9, 0
    %11 = vsyncpa [#allocation6], 0
    %s12 = scalar_lea.sflag [#allocation6], 1
    %13 = vsyncpa %s12, 0
    %14 = vsyncpa [#allocation4], 0
    %s15 = scalar_lea.sflag [#allocation4], 1
    %16 = vsyncpa %s15, 0
    loop: start=0, step=1, limit=7
    $region2: #{tpu_custom_call.1} parent=1 // loop_pre_header
      _
    $region3: #{tpu_custom_call.1} parent=1 // loop_header
      %s18 = sphi 0, %s22
      %p19 = scmp.ge.s32.totalorder %s18, 7
      %s25 = sphi 0, %s37
      %s26 = sphi 0, %s33
      %s27 = sphi 0, %s25
      %s28 = sphi 0, %s26
      %s29 = sphi 0, %s27
      %s30 = sphi 0, %s28
      %s40 = sphi 0, %s42
      %s43 = sphi 0, %s40
      %s44 = sphi 0, %s43
      %s60 = sphi 0, %s44
      %s68 = sphi 0, %s70
      %s71 = sphi 0, %s68
      %s72 = sphi 0, %s71
      %s88 = sphi 0, %s72
      %s96 = sphi 0, %s98
      %s99 = sphi 0, %s96
      %s100 = sphi 0, %s99
      %s116 = sphi 0, %s100
      %s124 = sphi 0, %s126
      %s127 = sphi 0, %s124
      %s128 = sphi 0, %s127
      %s144 = sphi 0, %s128
    $region4: #{tpu_custom_call.1} parent=1 // loop_header_branch
      %21 = sbr.rel (%p19) target = $region8
    $region5: #{tpu_custom_call.1} parent=1 // loop_body
      %s23 = ssub.s32 %s18, 1
      %s24 = ssub.s32 %s18, 2
      %s31 = sadd.s32 1, %s26
      %p32 = scmp.ge.s32.totalorder %s31, 1
      %s33 = scalar_select %p32, 0, %s31
      %s34 = sadd.s32 1, %s25
      %s35 = scalar_select %p32, %s34, %s25
      %p36 = scmp.ge.s32.totalorder %s35, 5
      %s37 = scalar_select %p36, 0, %s35
      %s38 = ssub.s32 %s25, %s37
      %p39 = scmp.eq.s32.totalorder %s38, 0
      %s41 = sadd.s32 %s40, 1
      %s42 = scalar_select %p39, %s40, %s41
      %p45 = pneg %p39
      %p46 = scmp.eq.s32.totalorder %s18, 4
      %p47 = por %p45, %p46
      %p48 = scmp.ne.s32.totalorder %s40, %s43
      %p49 = scmp.eq.s32.totalorder %s18, 0
      %p50 = por %p48, %p49
      %p51 = scmp.ne.s32.totalorder %s40, %s43
      %p52 = scmp.eq.s32.totalorder %s23, 4
      %p53 = por %p51, %p52
      %p54 = scmp.ne.s32.totalorder %s43, %s44
      %p55 = scmp.eq.s32.totalorder %s23, 0
      %p56 = por %p54, %p55
      %p57 = scmp.ne.s32.totalorder %s43, %s44
      %p58 = scmp.eq.s32.totalorder %s24, 4
      %p59 = por %p57, %p58
      %p61 = scmp.ne.s32.totalorder %s44, %s60
      %p62 = scmp.eq.s32.totalorder %s24, 0
      %p63 = por %p61, %p62
      %s64 = ssub.s32 %s25, %s37
      %s65 = ssub.s32 %s26, %s33
      %s66 = sor.u32 %s64, %s65
      %p67 = scmp.eq.s32.totalorder %s66, 0
      %s69 = sadd.s32 %s68, 1
      %s70 = scalar_select %p67, %s68, %s69
      %p73 = pneg %p67
      %p74 = scmp.eq.s32.totalorder %s18, 4
      %p75 = por %p73, %p74
      %p76 = scmp.ne.s32.totalorder %s68, %s71
      %p77 = scmp.eq.s32.totalorder %s18, 0
      %p78 = por %p76, %p77
      %p79 = scmp.ne.s32.totalorder %s68, %s71
      %p80 = scmp.eq.s32.totalorder %s23, 4
      %p81 = por %p79, %p80
      %p82 = scmp.ne.s32.totalorder %s71, %s72
      %p83 = scmp.eq.s32.totalorder %s23, 0
      %p84 = por %p82, %p83
      %p85 = scmp.ne.s32.totalorder %s71, %s72
      %p86 = scmp.eq.s32.totalorder %s24, 4
      %p87 = por %p85, %p86
      %p89 = scmp.ne.s32.totalorder %s72, %s88
      %p90 = scmp.eq.s32.totalorder %s24, 0
      %p91 = por %p89, %p90
      %s92 = ssub.s32 %s25, %s37
      %s93 = ssub.s32 %s26, %s33
      %s94 = sor.u32 %s92, %s93
      %p95 = scmp.eq.s32.totalorder %s94, 0
      %s97 = sadd.s32 %s96, 1
      %s98 = scalar_select %p95, %s96, %s97
      %p101 = pneg %p95
      %p102 = scmp.eq.s32.totalorder %s18, 4
      %p103 = por %p101, %p102
      %p104 = scmp.ne.s32.totalorder %s96, %s99
      %p105 = scmp.eq.s32.totalorder %s18, 0
      %p106 = por %p104, %p105
      %p107 = scmp.ne.s32.totalorder %s96, %s99
      %p108 = scmp.eq.s32.totalorder %s23, 4
      %p109 = por %p107, %p108
      %p110 = scmp.ne.s32.totalorder %s99, %s100
      %p111 = scmp.eq.s32.totalorder %s23, 0
      %p112 = por %p110, %p111
      %p113 = scmp.ne.s32.totalorder %s99, %s100
      %p114 = scmp.eq.s32.totalorder %s24, 4
      %p115 = por %p113, %p114
      %p117 = scmp.ne.s32.totalorder %s100, %s116
      %p118 = scmp.eq.s32.totalorder %s24, 0
      %p119 = por %p117, %p118
      %s120 = ssub.s32 %s25, %s37
      %s121 = ssub.s32 %s26, %s33
      %s122 = sor.u32 %s120, %s121
      %p123 = scmp.eq.s32.totalorder %s122, 0
      %s125 = sadd.s32 %s124, 1
      %s126 = scalar_select %p123, %s124, %s125
      %p129 = pneg %p123
      %p130 = scmp.eq.s32.totalorder %s18, 4
      %p131 = por %p129, %p130
      %p132 = scmp.ne.s32.totalorder %s124, %s127
      %p133 = scmp.eq.s32.totalorder %s18, 0
      %p134 = por %p132, %p133
      %p135 = scmp.ne.s32.totalorder %s124, %s127
      %p136 = scmp.eq.s32.totalorder %s23, 4
      %p137 = por %p135, %p136
      %p138 = scmp.ne.s32.totalorder %s127, %s128
      %p139 = scmp.eq.s32.totalorder %s23, 0
      %p140 = por %p138, %p139
      %p141 = scmp.ne.s32.totalorder %s127, %s128
      %p142 = scmp.eq.s32.totalorder %s24, 4
      %p143 = por %p141, %p142
      %p145 = scmp.ne.s32.totalorder %s128, %s144
      %p146 = scmp.eq.s32.totalorder %s24, 0
      %p147 = por %p145, %p146
      %p148 = scmp.le.s32.totalorder 1, %s18
      %p149 = scmp.lt.s32.totalorder %s18, 6
      %p150 = pnand %p148, %p149
      %p151 = pneg %p150
      // Predicated region
      $region9: #{tpu_custom_call.1} parent=5 // pred_check
        _
      $region10: #{tpu_custom_call.1} parent=5 // pred_check_branch
        %153 = sbr.rel (%p150) target = $region12
      $region11: #{tpu_custom_call.1} parent=5 // pred_region
        %s154 = ssub.s32 %s18, 1
      $region12: #{tpu_custom_call.1} parent=5 // pred_fallthru
        _
      %p155 = scmp.lt.s32.totalorder %s18, 5
      // Predicated region
      $region13: #{tpu_custom_call.1} parent=5 // pred_check
        %p156 = pneg %p155
      $region14: #{tpu_custom_call.1} parent=5 // pred_check_branch
        %158 = sbr.rel (%p156) target = $region16
      $region15: #{tpu_custom_call.1} parent=5 // pred_region
        // Predicated region
        $region17: #{tpu_custom_call.1} parent=15 // pred_check
          %p159 = pneg %p50
        $region18: #{tpu_custom_call.1} parent=15 // pred_check_branch
          %161 = sbr.rel (%p159) target = $region20
        $region19: #{tpu_custom_call.1} parent=15 // pred_region
          %s162 = sand.u32 %s40, 1
          %s163 = scalar_lea.sflag [#allocation3], %s162
          %s164 = sand.u32 %s40, 1
          %s165 = smul.addr %s164, 8
          %s166 = scalar_lea.vmem [#allocation2], %s165
          %s168 = ssub.s32 128, 128
          %169 = vsyncadd %s163, %s168
          %s170 = smul.addr %s25, 2
          %s171 = smul.addr %s170, 64
          %s172 = scalar_lea.hbm %s0, %s171
          %s174 = sshll.u32 %s166, 4
          %s175 = int_to_ptr.vmem [resolvable:$true] %s174
          %177 = dma.hbm_to_vmem [thread:$0]  %s172, 128, %s175, %s163
        $region20: #{tpu_custom_call.1} parent=15 // pred_fallthru
          _
        // Predicated region
        $region21: #{tpu_custom_call.1} parent=15 // pred_check
          %p178 = pneg %p78
        $region22: #{tpu_custom_call.1} parent=15 // pred_check_branch
          %180 = sbr.rel (%p178) target = $region24
        $region23: #{tpu_custom_call.1} parent=15 // pred_region
          %s181 = sand.u32 %s18, 1
          %s182 = scalar_lea.sflag [#allocation6], %s181
          %s183 = sand.u32 %s68, 1
          %s184 = smul.addr %s183, 2
          %s185 = scalar_lea.vmem [#allocation5], %s184
          %s186 = smul.u32 2, %s26
          %s188 = ssub.s32 32, 32
          %189 = vsyncadd %s182, %s188
          %s190 = smul.addr %s25, 2
          %s191 = sadd.s32 %s186, %s190
          %s192 = smul.addr %s191, 16
          %s193 = scalar_lea.hbm %s1, %s192
          %s195 = sshll.u32 %s185, 4
          %s196 = int_to_ptr.vmem [resolvable:$true] %s195
          %198 = dma.hbm_to_vmem [thread:$0]  %s193, 32, %s196, %s182
        $region24: #{tpu_custom_call.1} parent=15 // pred_fallthru
          _
        // Predicated region
        $region25: #{tpu_custom_call.1} parent=15 // pred_check
          %p199 = pneg %p106
        $region26: #{tpu_custom_call.1} parent=15 // pred_check_branch
          %201 = sbr.rel (%p199) target = $region28
        $region27: #{tpu_custom_call.1} parent=15 // pred_region
          %s202 = sand.u32 %s18, 1
          %s203 = scalar_lea.sflag [#allocation6], %s202
          %s204 = sand.u32 %s96, 1
          %s205 = smul.addr %s204, 2
          %s206 = scalar_lea.vmem [#allocation7], %s205
          %s207 = smul.u32 2, %s26
          %s209 = ssub.s32 32, 32
          %210 = vsyncadd %s203, %s209
          %s211 = smul.addr %s25, 2
          %s212 = sadd.s32 %s207, %s211
          %s213 = smul.addr %s212, 16
          %s214 = scalar_lea.hbm %s2, %s213
          %s216 = sshll.u32 %s206, 4
          %s217 = int_to_ptr.vmem [resolvable:$true] %s216
          %219 = dma.hbm_to_vmem [thread:$0]  %s214, 32, %s217, %s203
        $region28: #{tpu_custom_call.1} parent=15 // pred_fallthru
          _
      $region16: #{tpu_custom_call.1} parent=5 // pred_fallthru
        _
      %p220 = scmp.le.s32.totalorder 1, %s18
      %p221 = scmp.lt.s32.totalorder %s18, 6
      %p222 = pnand %p220, %p221
      %p223 = pneg %p222
      // Predicated region
      $region29: #{tpu_custom_call.1} parent=5 // pred_check
        _
      $region30: #{tpu_custom_call.1} parent=5 // pred_check_branch
        %225 = sbr.rel (%p222) target = $region32
      $region31: #{tpu_custom_call.1} parent=5 // pred_region
        %s226 = ssub.s32 %s18, 1
        %s227 = sand.u32 %s43, 1
        %s228 = scalar_lea.sflag [#allocation3], %s227
        %s229 = sand.u32 %s43, 1
        %s230 = smul.addr %s229, 8
        %s231 = scalar_lea.vmem [#allocation2], %s230
        // Predicated region
        $region33: #{tpu_custom_call.1} parent=31 // pred_check
          %p232 = pneg %p56
        $region34: #{tpu_custom_call.1} parent=31 // pred_check_branch
          %234 = sbr.rel (%p232) target = $region36
        $region35: #{tpu_custom_call.1} parent=31 // pred_region
          %235 = dma.done %s228, 128
        $region36: #{tpu_custom_call.1} parent=31 // pred_fallthru
          _
        %s236 = sand.u32 %s23, 1
        %s237 = scalar_lea.sflag [#allocation6], %s236
        %s238 = sand.u32 %s71, 1
        %s239 = smul.addr %s238, 2
        %s240 = scalar_lea.vmem [#allocation5], %s239
        // Predicated region
        $region37: #{tpu_custom_call.1} parent=31 // pred_check
          %p241 = pneg %p84
        $region38: #{tpu_custom_call.1} parent=31 // pred_check_branch
          %243 = sbr.rel (%p241) target = $region40
        $region39: #{tpu_custom_call.1} parent=31 // pred_region
          %244 = dma.done %s237, 32
        $region40: #{tpu_custom_call.1} parent=31 // pred_fallthru
          _
        %s245 = sand.u32 %s23, 1
        %s246 = scalar_lea.sflag [#allocation6], %s245
        %s247 = sand.u32 %s99, 1
        %s248 = smul.addr %s247, 2
        %s249 = scalar_lea.vmem [#allocation7], %s248
        // Predicated region
        $region41: #{tpu_custom_call.1} parent=31 // pred_check
          %p250 = pneg %p112
        $region42: #{tpu_custom_call.1} parent=31 // pred_check_branch
          %252 = sbr.rel (%p250) target = $region44
        $region43: #{tpu_custom_call.1} parent=31 // pred_region
          %253 = dma.done %s246, 32
        $region44: #{tpu_custom_call.1} parent=31 // pred_fallthru
          _
        %s254 = sand.u32 %s43, 1
        %s255 = scalar_lea.sflag [#allocation3], %s254
        %s256 = sand.u32 %s43, 1
        %s257 = smul.addr %s256, 8
        %s258 = scalar_lea.vmem [#allocation2], %s257
        %p259 = pneg %p56
        %p260 = pneg %p53
        %s261 = sand.u32 %s23, 1
        %s262 = scalar_lea.sflag [#allocation6], %s261
        %s263 = sand.u32 %s71, 1
        %s264 = smul.addr %s263, 2
        %s265 = scalar_lea.vmem [#allocation5], %s264
        %p266 = pneg %p84
        %p267 = pneg %p81
        %s268 = sand.u32 %s23, 1
        %s269 = scalar_lea.sflag [#allocation6], %s268
        %s270 = sand.u32 %s99, 1
        %s271 = smul.addr %s270, 2
        %s272 = scalar_lea.vmem [#allocation7], %s271
        %p273 = pneg %p112
        %p274 = pneg %p109
        %p275 = pneg %p140
        %p276 = pneg %p137
        %s277 = sand.u32 %s127, 1
        %s278 = scalar_lea.sflag [#allocation4], %s277
        %s279 = sand.u32 %s127, 1
        %s280 = smul.addr %s279, 4
        %s281 = scalar_lea.vmem [#allocation8], %s280
        %s282 = smul.u32 2, %s28
        %s283 = smul.u32 2, %s28
        %s284 = smul.u32 2, %s28
        %v285 = vld [vmem:[%s240] sm:$0x3]
        %v286 = vld [vmem:[%s249] sm:$0x3]
        %v287 = vadd.f32 %v285, 1.0
        %v288 = vmul.f32 %v287, 16.0
        %v289 = vsub.f32 %v288, 1.0
        %v290 = vmul.f32 %v289, 0.5
        %v291 = vadd.f32 %v286, 1.0
        %v292 = vmul.f32 %v291, 16.0
        %v293 = vsub.f32 %v292, 1.0
        %v294 = vmul.f32 %v293, 0.5
        %v295 = vfloor.f32 %v290
        %v296 = vfloor.f32 %v294
        %v297 = vsub.f32 %v290, %v295
        %v298 = vsub.f32 1.0, %v297
        %v299 = vsub.f32 %v294, %v296
        %v300 = vsub.f32 1.0, %v299
        %v301 = vcvt.f32.s32.to.zero.pseudo %v295
        %v302 = vcvt.f32.s32.to.zero.pseudo %v296
        %vm303 = vcmp.ge.s32.totalorder %v301, 0
        %vm304 = vcmp.le.s32.totalorder %v301, 15
        %vm305 = vmand %vm303, %vm304
        %vm306 = vcmp.ge.s32.totalorder %v301, 4294967295
        %vm307 = vcmp.le.s32.totalorder %v301, 14
        %vm308 = vmand %vm306, %vm307
        %vm309 = vcmp.ge.s32.totalorder %v302, 0
        %vm310 = vcmp.le.s32.totalorder %v302, 15
        %vm311 = vmand %vm309, %vm310
        %vm312 = vcmp.ge.s32.totalorder %v302, 4294967295
        %vm313 = vcmp.le.s32.totalorder %v302, 14
        %vm314 = vmand %vm312, %vm313
        %vm315 = vmand %vm305, %vm311
        %v316 = vmul.f32 %v298, %v300
        %v317 = vsel %vm315, %v316, 0.0
        %vm318 = vmand %vm308, %vm311
        %v319 = vmul.f32 %v297, %v300
        %v320 = vsel %vm318, %v319, 0.0
        %vm321 = vmand %vm305, %vm314
        %v322 = vmul.f32 %v298, %v299
        %v323 = vsel %vm321, %v322, 0.0
        %vm324 = vmand %vm308, %vm314
        %v325 = vmul.f32 %v297, %v299
        %v326 = vsel %vm324, %v325, 0.0
        %v327 = vmul.u32 %v302, 16
        %v328 = vadd.s32 %v327, %v301
        %v329 = vlaneseq
        %v330 = vshrl.u32 %v329, 7
        %v331 = vadd.s32 %v330, 8
        %v332 = vadd.s32 %v330, 16
        %v333 = vadd.s32 %v330, 24
        %v334 = vadd.s32 %v330, 32
        %v335 = vadd.s32 %v330, 40
        %v336 = vadd.s32 %v330, 48
        %v337 = vadd.s32 %v330, 56
        %v338 = vadd.s32 %v330, 64
        %v339 = vadd.s32 %v330, 72
        %v340 = vadd.s32 %v330, 80
        %v341 = vadd.s32 %v330, 88
        %v342 = vadd.s32 %v330, 96
        %v343 = vadd.s32 %v330, 104
        %v344 = vadd.s32 %v330, 112
        %v345 = vadd.s32 %v330, 120
        %v346 = vadd.s32 %v330, 128
        %v347 = vadd.s32 %v330, 136
        %v348 = vadd.s32 %v330, 144
        %v349 = vadd.s32 %v330, 152
        %v350 = vadd.s32 %v330, 160
        %v351 = vadd.s32 %v330, 168
        %v352 = vadd.s32 %v330, 176
        %v353 = vadd.s32 %v330, 184
        %v354 = vadd.s32 %v330, 192
        %v355 = vadd.s32 %v330, 200
        %v356 = vadd.s32 %v330, 208
        %v357 = vadd.s32 %v330, 216
        %v358 = vadd.s32 %v330, 224
        %v359 = vadd.s32 %v330, 232
        %v360 = vadd.s32 %v330, 240
        %v361 = vadd.s32 %v330, 248
        %v362 = vlaneseq
        %v363 = vshrl.u32 %v362, 7
        %v364 = vsub.s32 0, %v363
        %v365 = vrot.slane %v328, %v364
        %v366 = vlaneseq
        %v367 = vshrl.u32 %v366, 7
        %v368 = vsub.s32 1, %v367
        %v369 = vrot.slane %v328, %v368
        %v370 = vsub.s32 %v330, %v365
        %v371 = vsub.s32 %v330, %v369
        %v372 = vsub.s32 %v331, %v365
        %v373 = vsub.s32 %v331, %v369
        %v374 = vsub.s32 %v332, %v365
        %v375 = vsub.s32 %v332, %v369
        %v376 = vsub.s32 %v333, %v365
        %v377 = vsub.s32 %v333, %v369
        %v378 = vsub.s32 %v334, %v365
        %v379 = vsub.s32 %v334, %v369
        %v380 = vsub.s32 %v335, %v365
        %v381 = vsub.s32 %v335, %v369
        %v382 = vsub.s32 %v336, %v365
        %v383 = vsub.s32 %v336, %v369
        %v384 = vsub.s32 %v337, %v365
        %v385 = vsub.s32 %v337, %v369
        %v386 = vsub.s32 %v338, %v365
        %v387 = vsub.s32 %v338, %v369
        %v388 = vsub.s32 %v339, %v365
        %v389 = vsub.s32 %v339, %v369
        %v390 = vsub.s32 %v340, %v365
        %v391 = vsub.s32 %v340, %v369
        %v392 = vsub.s32 %v341, %v365
        %v393 = vsub.s32 %v341, %v369
        %v394 = vsub.s32 %v342, %v365
        %v395 = vsub.s32 %v342, %v369
        %v396 = vsub.s32 %v343, %v365
        %v397 = vsub.s32 %v343, %v369
        %v398 = vsub.s32 %v344, %v365
        %v399 = vsub.s32 %v344, %v369
        %v400 = vsub.s32 %v345, %v365
        %v401 = vsub.s32 %v345, %v369
        %v402 = vsub.s32 %v346, %v365
        %v403 = vsub.s32 %v346, %v369
        %v404 = vsub.s32 %v347, %v365
        %v405 = vsub.s32 %v347, %v369
        %v406 = vsub.s32 %v348, %v365
        %v407 = vsub.s32 %v348, %v369
        %v408 = vsub.s32 %v349, %v365
        %v409 = vsub.s32 %v349, %v369
        %v410 = vsub.s32 %v350, %v365
        %v411 = vsub.s32 %v350, %v369
        %v412 = vsub.s32 %v351, %v365
        %v413 = vsub.s32 %v351, %v369
        %v414 = vsub.s32 %v352, %v365
        %v415 = vsub.s32 %v352, %v369
        %v416 = vsub.s32 %v353, %v365
        %v417 = vsub.s32 %v353, %v369
        %v418 = vsub.s32 %v354, %v365
        %v419 = vsub.s32 %v354, %v369
        %v420 = vsub.s32 %v355, %v365
        %v421 = vsub.s32 %v355, %v369
        %v422 = vsub.s32 %v356, %v365
        %v423 = vsub.s32 %v356, %v369
        %v424 = vsub.s32 %v357, %v365
        %v425 = vsub.s32 %v357, %v369
        %v426 = vsub.s32 %v358, %v365
        %v427 = vsub.s32 %v358, %v369
        %v428 = vsub.s32 %v359, %v365
        %v429 = vsub.s32 %v359, %v369
        %v430 = vsub.s32 %v360, %v365
        %v431 = vsub.s32 %v360, %v369
        %v432 = vsub.s32 %v361, %v365
        %v433 = vsub.s32 %v361, %v369
        %vm434 = vcmp.eq.s32.totalorder %v370, 0
        %vm435 = vcmp.eq.s32.totalorder %v371, 0
        %vm436 = vcmp.eq.s32.totalorder %v372, 0
        %vm437 = vcmp.eq.s32.totalorder %v373, 0
        %vm438 = vcmp.eq.s32.totalorder %v374, 0
        %vm439 = vcmp.eq.s32.totalorder %v375, 0
        %vm440 = vcmp.eq.s32.totalorder %v376, 0
        %vm441 = vcmp.eq.s32.totalorder %v377, 0
        %vm442 = vcmp.eq.s32.totalorder %v378, 0
        %vm443 = vcmp.eq.s32.totalorder %v379, 0
        %vm444 = vcmp.eq.s32.totalorder %v380, 0
        %vm445 = vcmp.eq.s32.totalorder %v381, 0
        %vm446 = vcmp.eq.s32.totalorder %v382, 0
        %vm447 = vcmp.eq.s32.totalorder %v383, 0
        %vm448 = vcmp.eq.s32.totalorder %v384, 0
        %vm449 = vcmp.eq.s32.totalorder %v385, 0
        %vm450 = vcmp.eq.s32.totalorder %v386, 0
        %vm451 = vcmp.eq.s32.totalorder %v387, 0
        %vm452 = vcmp.eq.s32.totalorder %v388, 0
        %vm453 = vcmp.eq.s32.totalorder %v389, 0
        %vm454 = vcmp.eq.s32.totalorder %v390, 0
        %vm455 = vcmp.eq.s32.totalorder %v391, 0
        %vm456 = vcmp.eq.s32.totalorder %v392, 0
        %vm457 = vcmp.eq.s32.totalorder %v393, 0
        %vm458 = vcmp.eq.s32.totalorder %v394, 0
        %vm459 = vcmp.eq.s32.totalorder %v395, 0
        %vm460 = vcmp.eq.s32.totalorder %v396, 0
        %vm461 = vcmp.eq.s32.totalorder %v397, 0
        %vm462 = vcmp.eq.s32.totalorder %v398, 0
        %vm463 = vcmp.eq.s32.totalorder %v399, 0
        %vm464 = vcmp.eq.s32.totalorder %v400, 0
        %vm465 = vcmp.eq.s32.totalorder %v401, 0
        %vm466 = vcmp.eq.s32.totalorder %v402, 0
        %vm467 = vcmp.eq.s32.totalorder %v403, 0
        %vm468 = vcmp.eq.s32.totalorder %v404, 0
        %vm469 = vcmp.eq.s32.totalorder %v405, 0
        %vm470 = vcmp.eq.s32.totalorder %v406, 0
        %vm471 = vcmp.eq.s32.totalorder %v407, 0
        %vm472 = vcmp.eq.s32.totalorder %v408, 0
        %vm473 = vcmp.eq.s32.totalorder %v409, 0
        %vm474 = vcmp.eq.s32.totalorder %v410, 0
        %vm475 = vcmp.eq.s32.totalorder %v411, 0
        %vm476 = vcmp.eq.s32.totalorder %v412, 0
        %vm477 = vcmp.eq.s32.totalorder %v413, 0
        %vm478 = vcmp.eq.s32.totalorder %v414, 0
        %vm479 = vcmp.eq.s32.totalorder %v415, 0
        %vm480 = vcmp.eq.s32.totalorder %v416, 0
        %vm481 = vcmp.eq.s32.totalorder %v417, 0
        %vm482 = vcmp.eq.s32.totalorder %v418, 0
        %vm483 = vcmp.eq.s32.totalorder %v419, 0
        %vm484 = vcmp.eq.s32.totalorder %v420, 0
        %vm485 = vcmp.eq.s32.totalorder %v421, 0
        %vm486 = vcmp.eq.s32.totalorder %v422, 0
        %vm487 = vcmp.eq.s32.totalorder %v423, 0
        %vm488 = vcmp.eq.s32.totalorder %v424, 0
        %vm489 = vcmp.eq.s32.totalorder %v425, 0
        %vm490 = vcmp.eq.s32.totalorder %v426, 0
        %vm491 = vcmp.eq.s32.totalorder %v427, 0
        %vm492 = vcmp.eq.s32.totalorder %v428, 0
        %vm493 = vcmp.eq.s32.totalorder %v429, 0
        %vm494 = vcmp.eq.s32.totalorder %v430, 0
        %vm495 = vcmp.eq.s32.totalorder %v431, 0
        %vm496 = vcmp.eq.s32.totalorder %v432, 0
        %vm497 = vcmp.eq.s32.totalorder %v433, 0
        %v499 = vlaneseq
        %v500 = vshrl.u32 %v499, 7
        %v501 = vsub.s32 0, %v500
        %v502 = vrot.slane %v317, %v501
        %v503 = vlaneseq
        %v504 = vshrl.u32 %v503, 7
        %v505 = vsub.s32 1, %v504
        %v506 = vrot.slane %v317, %v505
        %v509 = vsel %vm434, %v502, 0.0
        %v510 = vsel %vm435, %v506, 0.0
        %v511 = vsel %vm436, %v502, 0.0
        %v512 = vsel %vm437, %v506, 0.0
        %v513 = vsel %vm438, %v502, 0.0
        %v514 = vsel %vm439, %v506, 0.0
        %v515 = vsel %vm440, %v502, 0.0
        %v516 = vsel %vm441, %v506, 0.0
        %v517 = vsel %vm442, %v502, 0.0
        %v518 = vsel %vm443, %v506, 0.0
        %v519 = vsel %vm444, %v502, 0.0
        %v520 = vsel %vm445, %v506, 0.0
        %v521 = vsel %vm446, %v502, 0.0
        %v522 = vsel %vm447, %v506, 0.0
        %v523 = vsel %vm448, %v502, 0.0
        %v524 = vsel %vm449, %v506, 0.0
        %v525 = vsel %vm450, %v502, 0.0
        %v526 = vsel %vm451, %v506, 0.0
        %v527 = vsel %vm452, %v502, 0.0
        %v528 = vsel %vm453, %v506, 0.0
        %v529 = vsel %vm454, %v502, 0.0
        %v530 = vsel %vm455, %v506, 0.0
        %v531 = vsel %vm456, %v502, 0.0
        %v532 = vsel %vm457, %v506, 0.0
        %v533 = vsel %vm458, %v502, 0.0
        %v534 = vsel %vm459, %v506, 0.0
        %v535 = vsel %vm460, %v502, 0.0
        %v536 = vsel %vm461, %v506, 0.0
        %v537 = vsel %vm462, %v502, 0.0
        %v538 = vsel %vm463, %v506, 0.0
        %v539 = vsel %vm464, %v502, 0.0
        %v540 = vsel %vm465, %v506, 0.0
        %v541 = vsel %vm466, %v502, 0.0
        %v542 = vsel %vm467, %v506, 0.0
        %v543 = vsel %vm468, %v502, 0.0
        %v544 = vsel %vm469, %v506, 0.0
        %v545 = vsel %vm470, %v502, 0.0
        %v546 = vsel %vm471, %v506, 0.0
        %v547 = vsel %vm472, %v502, 0.0
        %v548 = vsel %vm473, %v506, 0.0
        %v549 = vsel %vm474, %v502, 0.0
        %v550 = vsel %vm475, %v506, 0.0
        %v551 = vsel %vm476, %v502, 0.0
        %v552 = vsel %vm477, %v506, 0.0
        %v553 = vsel %vm478, %v502, 0.0
        %v554 = vsel %vm479, %v506, 0.0
        %v555 = vsel %vm480, %v502, 0.0
        %v556 = vsel %vm481, %v506, 0.0
        %v557 = vsel %vm482, %v502, 0.0
        %v558 = vsel %vm483, %v506, 0.0
        %v559 = vsel %vm484, %v502, 0.0
        %v560 = vsel %vm485, %v506, 0.0
        %v561 = vsel %vm486, %v502, 0.0
        %v562 = vsel %vm487, %v506, 0.0
        %v563 = vsel %vm488, %v502, 0.0
        %v564 = vsel %vm489, %v506, 0.0
        %v565 = vsel %vm490, %v502, 0.0
        %v566 = vsel %vm491, %v506, 0.0
        %v567 = vsel %vm492, %v502, 0.0
        %v568 = vsel %vm493, %v506, 0.0
        %v569 = vsel %vm494, %v502, 0.0
        %v570 = vsel %vm495, %v506, 0.0
        %v571 = vsel %vm496, %v502, 0.0
        %v572 = vsel %vm497, %v506, 0.0
        %vm573 = vcmp.eq.s32.totalorder %v370, 1
        %vm574 = vcmp.eq.s32.totalorder %v371, 1
        %vm575 = vcmp.eq.s32.totalorder %v372, 1
        %vm576 = vcmp.eq.s32.totalorder %v373, 1
        %vm577 = vcmp.eq.s32.totalorder %v374, 1
        %vm578 = vcmp.eq.s32.totalorder %v375, 1
        %vm579 = vcmp.eq.s32.totalorder %v376, 1
        %vm580 = vcmp.eq.s32.totalorder %v377, 1
        %vm581 = vcmp.eq.s32.totalorder %v378, 1
        %vm582 = vcmp.eq.s32.totalorder %v379, 1
        %vm583 = vcmp.eq.s32.totalorder %v380, 1
        %vm584 = vcmp.eq.s32.totalorder %v381, 1
        %vm585 = vcmp.eq.s32.totalorder %v382, 1
        %vm586 = vcmp.eq.s32.totalorder %v383, 1
        %vm587 = vcmp.eq.s32.totalorder %v384, 1
        %vm588 = vcmp.eq.s32.totalorder %v385, 1
        %vm589 = vcmp.eq.s32.totalorder %v386, 1
        %vm590 = vcmp.eq.s32.totalorder %v387, 1
        %vm591 = vcmp.eq.s32.totalorder %v388, 1
        %vm592 = vcmp.eq.s32.totalorder %v389, 1
        %vm593 = vcmp.eq.s32.totalorder %v390, 1
        %vm594 = vcmp.eq.s32.totalorder %v391, 1
        %vm595 = vcmp.eq.s32.totalorder %v392, 1
        %vm596 = vcmp.eq.s32.totalorder %v393, 1
        %vm597 = vcmp.eq.s32.totalorder %v394, 1
        %vm598 = vcmp.eq.s32.totalorder %v395, 1
        %vm599 = vcmp.eq.s32.totalorder %v396, 1
        %vm600 = vcmp.eq.s32.totalorder %v397, 1
        %vm601 = vcmp.eq.s32.totalorder %v398, 1
        %vm602 = vcmp.eq.s32.totalorder %v399, 1
        %vm603 = vcmp.eq.s32.totalorder %v400, 1
        %vm604 = vcmp.eq.s32.totalorder %v401, 1
        %vm605 = vcmp.eq.s32.totalorder %v402, 1
        %vm606 = vcmp.eq.s32.totalorder %v403, 1
        %vm607 = vcmp.eq.s32.totalorder %v404, 1
        %vm608 = vcmp.eq.s32.totalorder %v405, 1
        %vm609 = vcmp.eq.s32.totalorder %v406, 1
        %vm610 = vcmp.eq.s32.totalorder %v407, 1
        %vm611 = vcmp.eq.s32.totalorder %v408, 1
        %vm612 = vcmp.eq.s32.totalorder %v409, 1
        %vm613 = vcmp.eq.s32.totalorder %v410, 1
        %vm614 = vcmp.eq.s32.totalorder %v411, 1
        %vm615 = vcmp.eq.s32.totalorder %v412, 1
        %vm616 = vcmp.eq.s32.totalorder %v413, 1
        %vm617 = vcmp.eq.s32.totalorder %v414, 1
        %vm618 = vcmp.eq.s32.totalorder %v415, 1
        %vm619 = vcmp.eq.s32.totalorder %v416, 1
        %vm620 = vcmp.eq.s32.totalorder %v417, 1
        %vm621 = vcmp.eq.s32.totalorder %v418, 1
        %vm622 = vcmp.eq.s32.totalorder %v419, 1
        %vm623 = vcmp.eq.s32.totalorder %v420, 1
        %vm624 = vcmp.eq.s32.totalorder %v421, 1
        %vm625 = vcmp.eq.s32.totalorder %v422, 1
        %vm626 = vcmp.eq.s32.totalorder %v423, 1
        %vm627 = vcmp.eq.s32.totalorder %v424, 1
        %vm628 = vcmp.eq.s32.totalorder %v425, 1
        %vm629 = vcmp.eq.s32.totalorder %v426, 1
        %vm630 = vcmp.eq.s32.totalorder %v427, 1
        %vm631 = vcmp.eq.s32.totalorder %v428, 1
        %vm632 = vcmp.eq.s32.totalorder %v429, 1
        %vm633 = vcmp.eq.s32.totalorder %v430, 1
        %vm634 = vcmp.eq.s32.totalorder %v431, 1
        %vm635 = vcmp.eq.s32.totalorder %v432, 1
        %vm636 = vcmp.eq.s32.totalorder %v433, 1
        %v638 = vlaneseq
        %v639 = vshrl.u32 %v638, 7
        %v640 = vsub.s32 0, %v639
        %v641 = vrot.slane %v320, %v640
        %v642 = vlaneseq
        %v643 = vshrl.u32 %v642, 7
        %v644 = vsub.s32 1, %v643
        %v645 = vrot.slane %v320, %v644
        %v648 = vsel %vm573, %v641, 0.0
        %v649 = vsel %vm574, %v645, 0.0
        %v650 = vsel %vm575, %v641, 0.0
        %v651 = vsel %vm576, %v645, 0.0
        %v652 = vsel %vm577, %v641, 0.0
        %v653 = vsel %vm578, %v645, 0.0
        %v654 = vsel %vm579, %v641, 0.0
        %v655 = vsel %vm580, %v645, 0.0
        %v656 = vsel %vm581, %v641, 0.0
        %v657 = vsel %vm582, %v645, 0.0
        %v658 = vsel %vm583, %v641, 0.0
        %v659 = vsel %vm584, %v645, 0.0
        %v660 = vsel %vm585, %v641, 0.0
        %v661 = vsel %vm586, %v645, 0.0
        %v662 = vsel %vm587, %v641, 0.0
        %v663 = vsel %vm588, %v645, 0.0
        %v664 = vsel %vm589, %v641, 0.0
        %v665 = vsel %vm590, %v645, 0.0
        %v666 = vsel %vm591, %v641, 0.0
        %v667 = vsel %vm592, %v645, 0.0
        %v668 = vsel %vm593, %v641, 0.0
        %v669 = vsel %vm594, %v645, 0.0
        %v670 = vsel %vm595, %v641, 0.0
        %v671 = vsel %vm596, %v645, 0.0
        %v672 = vsel %vm597, %v641, 0.0
        %v673 = vsel %vm598, %v645, 0.0
        %v674 = vsel %vm599, %v641, 0.0
        %v675 = vsel %vm600, %v645, 0.0
        %v676 = vsel %vm601, %v641, 0.0
        %v677 = vsel %vm602, %v645, 0.0
        %v678 = vsel %vm603, %v641, 0.0
        %v679 = vsel %vm604, %v645, 0.0
        %v680 = vsel %vm605, %v641, 0.0
        %v681 = vsel %vm606, %v645, 0.0
        %v682 = vsel %vm607, %v641, 0.0
        %v683 = vsel %vm608, %v645, 0.0
        %v684 = vsel %vm609, %v641, 0.0
        %v685 = vsel %vm610, %v645, 0.0
        %v686 = vsel %vm611, %v641, 0.0
        %v687 = vsel %vm612, %v645, 0.0
        %v688 = vsel %vm613, %v641, 0.0
        %v689 = vsel %vm614, %v645, 0.0
        %v690 = vsel %vm615, %v641, 0.0
        %v691 = vsel %vm616, %v645, 0.0
        %v692 = vsel %vm617, %v641, 0.0
        %v693 = vsel %vm618, %v645, 0.0
        %v694 = vsel %vm619, %v641, 0.0
        %v695 = vsel %vm620, %v645, 0.0
        %v696 = vsel %vm621, %v641, 0.0
        %v697 = vsel %vm622, %v645, 0.0
        %v698 = vsel %vm623, %v641, 0.0
        %v699 = vsel %vm624, %v645, 0.0
        %v700 = vsel %vm625, %v641, 0.0
        %v701 = vsel %vm626, %v645, 0.0
        %v702 = vsel %vm627, %v641, 0.0
        %v703 = vsel %vm628, %v645, 0.0
        %v704 = vsel %vm629, %v641, 0.0
        %v705 = vsel %vm630, %v645, 0.0
        %v706 = vsel %vm631, %v641, 0.0
        %v707 = vsel %vm632, %v645, 0.0
        %v708 = vsel %vm633, %v641, 0.0
        %v709 = vsel %vm634, %v645, 0.0
        %v710 = vsel %vm635, %v641, 0.0
        %v711 = vsel %vm636, %v645, 0.0
        %v712 = vadd.f32 %v509, %v648
        %v713 = vadd.f32 %v510, %v649
        %v714 = vadd.f32 %v511, %v650
        %v715 = vadd.f32 %v512, %v651
        %v716 = vadd.f32 %v513, %v652
        %v717 = vadd.f32 %v514, %v653
        %v718 = vadd.f32 %v515, %v654
        %v719 = vadd.f32 %v516, %v655
        %v720 = vadd.f32 %v517, %v656
        %v721 = vadd.f32 %v518, %v657
        %v722 = vadd.f32 %v519, %v658
        %v723 = vadd.f32 %v520, %v659
        %v724 = vadd.f32 %v521, %v660
        %v725 = vadd.f32 %v522, %v661
        %v726 = vadd.f32 %v523, %v662
        %v727 = vadd.f32 %v524, %v663
        %v728 = vadd.f32 %v525, %v664
        %v729 = vadd.f32 %v526, %v665
        %v730 = vadd.f32 %v527, %v666
        %v731 = vadd.f32 %v528, %v667
        %v732 = vadd.f32 %v529, %v668
        %v733 = vadd.f32 %v530, %v669
        %v734 = vadd.f32 %v531, %v670
        %v735 = vadd.f32 %v532, %v671
        %v736 = vadd.f32 %v533, %v672
        %v737 = vadd.f32 %v534, %v673
        %v738 = vadd.f32 %v535, %v674
        %v739 = vadd.f32 %v536, %v675
        %v740 = vadd.f32 %v537, %v676
        %v741 = vadd.f32 %v538, %v677
        %v742 = vadd.f32 %v539, %v678
        %v743 = vadd.f32 %v540, %v679
        %v744 = vadd.f32 %v541, %v680
        %v745 = vadd.f32 %v542, %v681
        %v746 = vadd.f32 %v543, %v682
        %v747 = vadd.f32 %v544, %v683
        %v748 = vadd.f32 %v545, %v684
        %v749 = vadd.f32 %v546, %v685
        %v750 = vadd.f32 %v547, %v686
        %v751 = vadd.f32 %v548, %v687
        %v752 = vadd.f32 %v549, %v688
        %v753 = vadd.f32 %v550, %v689
        %v754 = vadd.f32 %v551, %v690
        %v755 = vadd.f32 %v552, %v691
        %v756 = vadd.f32 %v553, %v692
        %v757 = vadd.f32 %v554, %v693
        %v758 = vadd.f32 %v555, %v694
        %v759 = vadd.f32 %v556, %v695
        %v760 = vadd.f32 %v557, %v696
        %v761 = vadd.f32 %v558, %v697
        %v762 = vadd.f32 %v559, %v698
        %v763 = vadd.f32 %v560, %v699
        %v764 = vadd.f32 %v561, %v700
        %v765 = vadd.f32 %v562, %v701
        %v766 = vadd.f32 %v563, %v702
        %v767 = vadd.f32 %v564, %v703
        %v768 = vadd.f32 %v565, %v704
        %v769 = vadd.f32 %v566, %v705
        %v770 = vadd.f32 %v567, %v706
        %v771 = vadd.f32 %v568, %v707
        %v772 = vadd.f32 %v569, %v708
        %v773 = vadd.f32 %v570, %v709
        %v774 = vadd.f32 %v571, %v710
        %v775 = vadd.f32 %v572, %v711
        %vm776 = vcmp.eq.s32.totalorder %v370, 16
        %vm777 = vcmp.eq.s32.totalorder %v371, 16
        %vm778 = vcmp.eq.s32.totalorder %v372, 16
        %vm779 = vcmp.eq.s32.totalorder %v373, 16
        %vm780 = vcmp.eq.s32.totalorder %v374, 16
        %vm781 = vcmp.eq.s32.totalorder %v375, 16
        %vm782 = vcmp.eq.s32.totalorder %v376, 16
        %vm783 = vcmp.eq.s32.totalorder %v377, 16
        %vm784 = vcmp.eq.s32.totalorder %v378, 16
        %vm785 = vcmp.eq.s32.totalorder %v379, 16
        %vm786 = vcmp.eq.s32.totalorder %v380, 16
        %vm787 = vcmp.eq.s32.totalorder %v381, 16
        %vm788 = vcmp.eq.s32.totalorder %v382, 16
        %vm789 = vcmp.eq.s32.totalorder %v383, 16
        %vm790 = vcmp.eq.s32.totalorder %v384, 16
        %vm791 = vcmp.eq.s32.totalorder %v385, 16
        %vm792 = vcmp.eq.s32.totalorder %v386, 16
        %vm793 = vcmp.eq.s32.totalorder %v387, 16
        %vm794 = vcmp.eq.s32.totalorder %v388, 16
        %vm795 = vcmp.eq.s32.totalorder %v389, 16
        %vm796 = vcmp.eq.s32.totalorder %v390, 16
        %vm797 = vcmp.eq.s32.totalorder %v391, 16
        %vm798 = vcmp.eq.s32.totalorder %v392, 16
        %vm799 = vcmp.eq.s32.totalorder %v393, 16
        %vm800 = vcmp.eq.s32.totalorder %v394, 16
        %vm801 = vcmp.eq.s32.totalorder %v395, 16
        %vm802 = vcmp.eq.s32.totalorder %v396, 16
        %vm803 = vcmp.eq.s32.totalorder %v397, 16
        %vm804 = vcmp.eq.s32.totalorder %v398, 16
        %vm805 = vcmp.eq.s32.totalorder %v399, 16
        %vm806 = vcmp.eq.s32.totalorder %v400, 16
        %vm807 = vcmp.eq.s32.totalorder %v401, 16
        %vm808 = vcmp.eq.s32.totalorder %v402, 16
        %vm809 = vcmp.eq.s32.totalorder %v403, 16
        %vm810 = vcmp.eq.s32.totalorder %v404, 16
        %vm811 = vcmp.eq.s32.totalorder %v405, 16
        %vm812 = vcmp.eq.s32.totalorder %v406, 16
        %vm813 = vcmp.eq.s32.totalorder %v407, 16
        %vm814 = vcmp.eq.s32.totalorder %v408, 16
        %vm815 = vcmp.eq.s32.totalorder %v409, 16
        %vm816 = vcmp.eq.s32.totalorder %v410, 16
        %vm817 = vcmp.eq.s32.totalorder %v411, 16
        %vm818 = vcmp.eq.s32.totalorder %v412, 16
        %vm819 = vcmp.eq.s32.totalorder %v413, 16
        %vm820 = vcmp.eq.s32.totalorder %v414, 16
        %vm821 = vcmp.eq.s32.totalorder %v415, 16
        %vm822 = vcmp.eq.s32.totalorder %v416, 16
        %vm823 = vcmp.eq.s32.totalorder %v417, 16
        %vm824 = vcmp.eq.s32.totalorder %v418, 16
        %vm825 = vcmp.eq.s32.totalorder %v419, 16
        %vm826 = vcmp.eq.s32.totalorder %v420, 16
        %vm827 = vcmp.eq.s32.totalorder %v421, 16
        %vm828 = vcmp.eq.s32.totalorder %v422, 16
        %vm829 = vcmp.eq.s32.totalorder %v423, 16
        %vm830 = vcmp.eq.s32.totalorder %v424, 16
        %vm831 = vcmp.eq.s32.totalorder %v425, 16
        %vm832 = vcmp.eq.s32.totalorder %v426, 16
        %vm833 = vcmp.eq.s32.totalorder %v427, 16
        %vm834 = vcmp.eq.s32.totalorder %v428, 16
        %vm835 = vcmp.eq.s32.totalorder %v429, 16
        %vm836 = vcmp.eq.s32.totalorder %v430, 16
        %vm837 = vcmp.eq.s32.totalorder %v431, 16
        %vm838 = vcmp.eq.s32.totalorder %v432, 16
        %vm839 = vcmp.eq.s32.totalorder %v433, 16
        %v841 = vlaneseq
        %v842 = vshrl.u32 %v841, 7
        %v843 = vsub.s32 0, %v842
        %v844 = vrot.slane %v323, %v843
        %v845 = vlaneseq
        %v846 = vshrl.u32 %v845, 7
        %v847 = vsub.s32 1, %v846
        %v848 = vrot.slane %v323, %v847
        %v851 = vsel %vm776, %v844, 0.0
        %v852 = vsel %vm777, %v848, 0.0
        %v853 = vsel %vm778, %v844, 0.0
        %v854 = vsel %vm779, %v848, 0.0
        %v855 = vsel %vm780, %v844, 0.0
        %v856 = vsel %vm781, %v848, 0.0
        %v857 = vsel %vm782, %v844, 0.0
        %v858 = vsel %vm783, %v848, 0.0
        %v859 = vsel %vm784, %v844, 0.0
        %v860 = vsel %vm785, %v848, 0.0
        %v861 = vsel %vm786, %v844, 0.0
        %v862 = vsel %vm787, %v848, 0.0
        %v863 = vsel %vm788, %v844, 0.0
        %v864 = vsel %vm789, %v848, 0.0
        %v865 = vsel %vm790, %v844, 0.0
        %v866 = vsel %vm791, %v848, 0.0
        %v867 = vsel %vm792, %v844, 0.0
        %v868 = vsel %vm793, %v848, 0.0
        %v869 = vsel %vm794, %v844, 0.0
        %v870 = vsel %vm795, %v848, 0.0
        %v871 = vsel %vm796, %v844, 0.0
        %v872 = vsel %vm797, %v848, 0.0
        %v873 = vsel %vm798, %v844, 0.0
        %v874 = vsel %vm799, %v848, 0.0
        %v875 = vsel %vm800, %v844, 0.0
        %v876 = vsel %vm801, %v848, 0.0
        %v877 = vsel %vm802, %v844, 0.0
        %v878 = vsel %vm803, %v848, 0.0
        %v879 = vsel %vm804, %v844, 0.0
        %v880 = vsel %vm805, %v848, 0.0
        %v881 = vsel %vm806, %v844, 0.0
        %v882 = vsel %vm807, %v848, 0.0
        %v883 = vsel %vm808, %v844, 0.0
        %v884 = vsel %vm809, %v848, 0.0
        %v885 = vsel %vm810, %v844, 0.0
        %v886 = vsel %vm811, %v848, 0.0
        %v887 = vsel %vm812, %v844, 0.0
        %v888 = vsel %vm813, %v848, 0.0
        %v889 = vsel %vm814, %v844, 0.0
        %v890 = vsel %vm815, %v848, 0.0
        %v891 = vsel %vm816, %v844, 0.0
        %v892 = vsel %vm817, %v848, 0.0
        %v893 = vsel %vm818, %v844, 0.0
        %v894 = vsel %vm819, %v848, 0.0
        %v895 = vsel %vm820, %v844, 0.0
        %v896 = vsel %vm821, %v848, 0.0
        %v897 = vsel %vm822, %v844, 0.0
        %v898 = vsel %vm823, %v848, 0.0
        %v899 = vsel %vm824, %v844, 0.0
        %v900 = vsel %vm825, %v848, 0.0
        %v901 = vsel %vm826, %v844, 0.0
        %v902 = vsel %vm827, %v848, 0.0
        %v903 = vsel %vm828, %v844, 0.0
        %v904 = vsel %vm829, %v848, 0.0
        %v905 = vsel %vm830, %v844, 0.0
        %v906 = vsel %vm831, %v848, 0.0
        %v907 = vsel %vm832, %v844, 0.0
        %v908 = vsel %vm833, %v848, 0.0
        %v909 = vsel %vm834, %v844, 0.0
        %v910 = vsel %vm835, %v848, 0.0
        %v911 = vsel %vm836, %v844, 0.0
        %v912 = vsel %vm837, %v848, 0.0
        %v913 = vsel %vm838, %v844, 0.0
        %v914 = vsel %vm839, %v848, 0.0
        %v915 = vadd.f32 %v712, %v851
        %v916 = vadd.f32 %v713, %v852
        %v917 = vadd.f32 %v714, %v853
        %v918 = vadd.f32 %v715, %v854
        %v919 = vadd.f32 %v716, %v855
        %v920 = vadd.f32 %v717, %v856
        %v921 = vadd.f32 %v718, %v857
        %v922 = vadd.f32 %v719, %v858
        %v923 = vadd.f32 %v720, %v859
        %v924 = vadd.f32 %v721, %v860
        %v925 = vadd.f32 %v722, %v861
        %v926 = vadd.f32 %v723, %v862
        %v927 = vadd.f32 %v724, %v863
        %v928 = vadd.f32 %v725, %v864
        %v929 = vadd.f32 %v726, %v865
        %v930 = vadd.f32 %v727, %v866
        %v931 = vadd.f32 %v728, %v867
        %v932 = vadd.f32 %v729, %v868
        %v933 = vadd.f32 %v730, %v869
        %v934 = vadd.f32 %v731, %v870
        %v935 = vadd.f32 %v732, %v871
        %v936 = vadd.f32 %v733, %v872
        %v937 = vadd.f32 %v734, %v873
        %v938 = vadd.f32 %v735, %v874
        %v939 = vadd.f32 %v736, %v875
        %v940 = vadd.f32 %v737, %v876
        %v941 = vadd.f32 %v738, %v877
        %v942 = vadd.f32 %v739, %v878
        %v943 = vadd.f32 %v740, %v879
        %v944 = vadd.f32 %v741, %v880
        %v945 = vadd.f32 %v742, %v881
        %v946 = vadd.f32 %v743, %v882
        %v947 = vadd.f32 %v744, %v883
        %v948 = vadd.f32 %v745, %v884
        %v949 = vadd.f32 %v746, %v885
        %v950 = vadd.f32 %v747, %v886
        %v951 = vadd.f32 %v748, %v887
        %v952 = vadd.f32 %v749, %v888
        %v953 = vadd.f32 %v750, %v889
        %v954 = vadd.f32 %v751, %v890
        %v955 = vadd.f32 %v752, %v891
        %v956 = vadd.f32 %v753, %v892
        %v957 = vadd.f32 %v754, %v893
        %v958 = vadd.f32 %v755, %v894
        %v959 = vadd.f32 %v756, %v895
        %v960 = vadd.f32 %v757, %v896
        %v961 = vadd.f32 %v758, %v897
        %v962 = vadd.f32 %v759, %v898
        %v963 = vadd.f32 %v760, %v899
        %v964 = vadd.f32 %v761, %v900
        %v965 = vadd.f32 %v762, %v901
        %v966 = vadd.f32 %v763, %v902
        %v967 = vadd.f32 %v764, %v903
        %v968 = vadd.f32 %v765, %v904
        %v969 = vadd.f32 %v766, %v905
        %v970 = vadd.f32 %v767, %v906
        %v971 = vadd.f32 %v768, %v907
        %v972 = vadd.f32 %v769, %v908
        %v973 = vadd.f32 %v770, %v909
        %v974 = vadd.f32 %v771, %v910
        %v975 = vadd.f32 %v772, %v911
        %v976 = vadd.f32 %v773, %v912
        %v977 = vadd.f32 %v774, %v913
        %v978 = vadd.f32 %v775, %v914
        %vm979 = vcmp.eq.s32.totalorder %v370, 17
        %vm980 = vcmp.eq.s32.totalorder %v371, 17
        %vm981 = vcmp.eq.s32.totalorder %v372, 17
        %vm982 = vcmp.eq.s32.totalorder %v373, 17
        %vm983 = vcmp.eq.s32.totalorder %v374, 17
        %vm984 = vcmp.eq.s32.totalorder %v375, 17
        %vm985 = vcmp.eq.s32.totalorder %v376, 17
        %vm986 = vcmp.eq.s32.totalorder %v377, 17
        %vm987 = vcmp.eq.s32.totalorder %v378, 17
        %vm988 = vcmp.eq.s32.totalorder %v379, 17
        %vm989 = vcmp.eq.s32.totalorder %v380, 17
        %vm990 = vcmp.eq.s32.totalorder %v381, 17
        %vm991 = vcmp.eq.s32.totalorder %v382, 17
        %vm992 = vcmp.eq.s32.totalorder %v383, 17
        %vm993 = vcmp.eq.s32.totalorder %v384, 17
        %vm994 = vcmp.eq.s32.totalorder %v385, 17
        %vm995 = vcmp.eq.s32.totalorder %v386, 17
        %vm996 = vcmp.eq.s32.totalorder %v387, 17
        %vm997 = vcmp.eq.s32.totalorder %v388, 17
        %vm998 = vcmp.eq.s32.totalorder %v389, 17
        %vm999 = vcmp.eq.s32.totalorder %v390, 17
        %vm1000 = vcmp.eq.s32.totalorder %v391, 17
        %vm1001 = vcmp.eq.s32.totalorder %v392, 17
        %vm1002 = vcmp.eq.s32.totalorder %v393, 17
        %vm1003 = vcmp.eq.s32.totalorder %v394, 17
        %vm1004 = vcmp.eq.s32.totalorder %v395, 17
        %vm1005 = vcmp.eq.s32.totalorder %v396, 17
        %vm1006 = vcmp.eq.s32.totalorder %v397, 17
        %vm1007 = vcmp.eq.s32.totalorder %v398, 17
        %vm1008 = vcmp.eq.s32.totalorder %v399, 17
        %vm1009 = vcmp.eq.s32.totalorder %v400, 17
        %vm1010 = vcmp.eq.s32.totalorder %v401, 17
        %vm1011 = vcmp.eq.s32.totalorder %v402, 17
        %vm1012 = vcmp.eq.s32.totalorder %v403, 17
        %vm1013 = vcmp.eq.s32.totalorder %v404, 17
        %vm1014 = vcmp.eq.s32.totalorder %v405, 17
        %vm1015 = vcmp.eq.s32.totalorder %v406, 17
        %vm1016 = vcmp.eq.s32.totalorder %v407, 17
        %vm1017 = vcmp.eq.s32.totalorder %v408, 17
        %vm1018 = vcmp.eq.s32.totalorder %v409, 17
        %vm1019 = vcmp.eq.s32.totalorder %v410, 17
        %vm1020 = vcmp.eq.s32.totalorder %v411, 17
        %vm1021 = vcmp.eq.s32.totalorder %v412, 17
        %vm1022 = vcmp.eq.s32.totalorder %v413, 17
        %vm1023 = vcmp.eq.s32.totalorder %v414, 17
        %vm1024 = vcmp.eq.s32.totalorder %v415, 17
        %vm1025 = vcmp.eq.s32.totalorder %v416, 17
        %vm1026 = vcmp.eq.s32.totalorder %v417, 17
        %vm1027 = vcmp.eq.s32.totalorder %v418, 17
        %vm1028 = vcmp.eq.s32.totalorder %v419, 17
        %vm1029 = vcmp.eq.s32.totalorder %v420, 17
        %vm1030 = vcmp.eq.s32.totalorder %v421, 17
        %vm1031 = vcmp.eq.s32.totalorder %v422, 17
        %vm1032 = vcmp.eq.s32.totalorder %v423, 17
        %vm1033 = vcmp.eq.s32.totalorder %v424, 17
        %vm1034 = vcmp.eq.s32.totalorder %v425, 17
        %vm1035 = vcmp.eq.s32.totalorder %v426, 17
        %vm1036 = vcmp.eq.s32.totalorder %v427, 17
        %vm1037 = vcmp.eq.s32.totalorder %v428, 17
        %vm1038 = vcmp.eq.s32.totalorder %v429, 17
        %vm1039 = vcmp.eq.s32.totalorder %v430, 17
        %vm1040 = vcmp.eq.s32.totalorder %v431, 17
        %vm1041 = vcmp.eq.s32.totalorder %v432, 17
        %vm1042 = vcmp.eq.s32.totalorder %v433, 17
        %v1044 = vlaneseq
        %v1045 = vshrl.u32 %v1044, 7
        %v1046 = vsub.s32 0, %v1045
        %v1047 = vrot.slane %v326, %v1046
        %v1048 = vlaneseq
        %v1049 = vshrl.u32 %v1048, 7
        %v1050 = vsub.s32 1, %v1049
        %v1051 = vrot.slane %v326, %v1050
        %v1054 = vsel %vm979, %v1047, 0.0
        %v1055 = vsel %vm980, %v1051, 0.0
        %v1056 = vsel %vm981, %v1047, 0.0
        %v1057 = vsel %vm982, %v1051, 0.0
        %v1058 = vsel %vm983, %v1047, 0.0
        %v1059 = vsel %vm984, %v1051, 0.0
        %v1060 = vsel %vm985, %v1047, 0.0
        %v1061 = vsel %vm986, %v1051, 0.0
        %v1062 = vsel %vm987, %v1047, 0.0
        %v1063 = vsel %vm988, %v1051, 0.0
        %v1064 = vsel %vm989, %v1047, 0.0
        %v1065 = vsel %vm990, %v1051, 0.0
        %v1066 = vsel %vm991, %v1047, 0.0
        %v1067 = vsel %vm992, %v1051, 0.0
        %v1068 = vsel %vm993, %v1047, 0.0
        %v1069 = vsel %vm994, %v1051, 0.0
        %v1070 = vsel %vm995, %v1047, 0.0
        %v1071 = vsel %vm996, %v1051, 0.0
        %v1072 = vsel %vm997, %v1047, 0.0
        %v1073 = vsel %vm998, %v1051, 0.0
        %v1074 = vsel %vm999, %v1047, 0.0
        %v1075 = vsel %vm1000, %v1051, 0.0
        %v1076 = vsel %vm1001, %v1047, 0.0
        %v1077 = vsel %vm1002, %v1051, 0.0
        %v1078 = vsel %vm1003, %v1047, 0.0
        %v1079 = vsel %vm1004, %v1051, 0.0
        %v1080 = vsel %vm1005, %v1047, 0.0
        %v1081 = vsel %vm1006, %v1051, 0.0
        %v1082 = vsel %vm1007, %v1047, 0.0
        %v1083 = vsel %vm1008, %v1051, 0.0
        %v1084 = vsel %vm1009, %v1047, 0.0
        %v1085 = vsel %vm1010, %v1051, 0.0
        %v1086 = vsel %vm1011, %v1047, 0.0
        %v1087 = vsel %vm1012, %v1051, 0.0
        %v1088 = vsel %vm1013, %v1047, 0.0
        %v1089 = vsel %vm1014, %v1051, 0.0
        %v1090 = vsel %vm1015, %v1047, 0.0
        %v1091 = vsel %vm1016, %v1051, 0.0
        %v1092 = vsel %vm1017, %v1047, 0.0
        %v1093 = vsel %vm1018, %v1051, 0.0
        %v1094 = vsel %vm1019, %v1047, 0.0
        %v1095 = vsel %vm1020, %v1051, 0.0
        %v1096 = vsel %vm1021, %v1047, 0.0
        %v1097 = vsel %vm1022, %v1051, 0.0
        %v1098 = vsel %vm1023, %v1047, 0.0
        %v1099 = vsel %vm1024, %v1051, 0.0
        %v1100 = vsel %vm1025, %v1047, 0.0
        %v1101 = vsel %vm1026, %v1051, 0.0
        %v1102 = vsel %vm1027, %v1047, 0.0
        %v1103 = vsel %vm1028, %v1051, 0.0
        %v1104 = vsel %vm1029, %v1047, 0.0
        %v1105 = vsel %vm1030, %v1051, 0.0
        %v1106 = vsel %vm1031, %v1047, 0.0
        %v1107 = vsel %vm1032, %v1051, 0.0
        %v1108 = vsel %vm1033, %v1047, 0.0
        %v1109 = vsel %vm1034, %v1051, 0.0
        %v1110 = vsel %vm1035, %v1047, 0.0
        %v1111 = vsel %vm1036, %v1051, 0.0
        %v1112 = vsel %vm1037, %v1047, 0.0
        %v1113 = vsel %vm1038, %v1051, 0.0
        %v1114 = vsel %vm1039, %v1047, 0.0
        %v1115 = vsel %vm1040, %v1051, 0.0
        %v1116 = vsel %vm1041, %v1047, 0.0
        %v1117 = vsel %vm1042, %v1051, 0.0
        %v1118 = vadd.f32 %v915, %v1054
        %v1119 = vadd.f32 %v916, %v1055
        %v1120 = vadd.f32 %v917, %v1056
        %v1121 = vadd.f32 %v918, %v1057
        %v1122 = vadd.f32 %v919, %v1058
        %v1123 = vadd.f32 %v920, %v1059
        %v1124 = vadd.f32 %v921, %v1060
        %v1125 = vadd.f32 %v922, %v1061
        %v1126 = vadd.f32 %v923, %v1062
        %v1127 = vadd.f32 %v924, %v1063
        %v1128 = vadd.f32 %v925, %v1064
        %v1129 = vadd.f32 %v926, %v1065
        %v1130 = vadd.f32 %v927, %v1066
        %v1131 = vadd.f32 %v928, %v1067
        %v1132 = vadd.f32 %v929, %v1068
        %v1133 = vadd.f32 %v930, %v1069
        %v1134 = vadd.f32 %v931, %v1070
        %v1135 = vadd.f32 %v932, %v1071
        %v1136 = vadd.f32 %v933, %v1072
        %v1137 = vadd.f32 %v934, %v1073
        %v1138 = vadd.f32 %v935, %v1074
        %v1139 = vadd.f32 %v936, %v1075
        %v1140 = vadd.f32 %v937, %v1076
        %v1141 = vadd.f32 %v938, %v1077
        %v1142 = vadd.f32 %v939, %v1078
        %v1143 = vadd.f32 %v940, %v1079
        %v1144 = vadd.f32 %v941, %v1080
        %v1145 = vadd.f32 %v942, %v1081
        %v1146 = vadd.f32 %v943, %v1082
        %v1147 = vadd.f32 %v944, %v1083
        %v1148 = vadd.f32 %v945, %v1084
        %v1149 = vadd.f32 %v946, %v1085
        %v1150 = vadd.f32 %v947, %v1086
        %v1151 = vadd.f32 %v948, %v1087
        %v1152 = vadd.f32 %v949, %v1088
        %v1153 = vadd.f32 %v950, %v1089
        %v1154 = vadd.f32 %v951, %v1090
        %v1155 = vadd.f32 %v952, %v1091
        %v1156 = vadd.f32 %v953, %v1092
        %v1157 = vadd.f32 %v954, %v1093
        %v1158 = vadd.f32 %v955, %v1094
        %v1159 = vadd.f32 %v956, %v1095
        %v1160 = vadd.f32 %v957, %v1096
        %v1161 = vadd.f32 %v958, %v1097
        %v1162 = vadd.f32 %v959, %v1098
        %v1163 = vadd.f32 %v960, %v1099
        %v1164 = vadd.f32 %v961, %v1100
        %v1165 = vadd.f32 %v962, %v1101
        %v1166 = vadd.f32 %v963, %v1102
        %v1167 = vadd.f32 %v964, %v1103
        %v1168 = vadd.f32 %v965, %v1104
        %v1169 = vadd.f32 %v966, %v1105
        %v1170 = vadd.f32 %v967, %v1106
        %v1171 = vadd.f32 %v968, %v1107
        %v1172 = vadd.f32 %v969, %v1108
        %v1173 = vadd.f32 %v970, %v1109
        %v1174 = vadd.f32 %v971, %v1110
        %v1175 = vadd.f32 %v972, %v1111
        %v1176 = vadd.f32 %v973, %v1112
        %v1177 = vadd.f32 %v974, %v1113
        %v1178 = vadd.f32 %v975, %v1114
        %v1179 = vadd.f32 %v976, %v1115
        %v1180 = vadd.f32 %v977, %v1116
        %v1181 = vadd.f32 %v978, %v1117
        %v1182 = vpack.c.bf16 %v1120, %v1118
        %v1183 = vpack.c.bf16 %v1121, %v1119
        %v1184 = vpack.c.bf16 %v1124, %v1122
        %v1185 = vpack.c.bf16 %v1125, %v1123
        %v1186 = vpack.c.bf16 %v1128, %v1126
        %v1187 = vpack.c.bf16 %v1129, %v1127
        %v1188 = vpack.c.bf16 %v1132, %v1130
        %v1189 = vpack.c.bf16 %v1133, %v1131
        %v1190 = vpack.c.bf16 %v1136, %v1134
        %v1191 = vpack.c.bf16 %v1137, %v1135
        %v1192 = vpack.c.bf16 %v1140, %v1138
        %v1193 = vpack.c.bf16 %v1141, %v1139
        %v1194 = vpack.c.bf16 %v1144, %v1142
        %v1195 = vpack.c.bf16 %v1145, %v1143
        %v1196 = vpack.c.bf16 %v1148, %v1146
        %v1197 = vpack.c.bf16 %v1149, %v1147
        %v1198 = vpack.c.bf16 %v1152, %v1150
        %v1199 = vpack.c.bf16 %v1153, %v1151
        %v1200 = vpack.c.bf16 %v1156, %v1154
        %v1201 = vpack.c.bf16 %v1157, %v1155
        %v1202 = vpack.c.bf16 %v1160, %v1158
        %v1203 = vpack.c.bf16 %v1161, %v1159
        %v1204 = vpack.c.bf16 %v1164, %v1162
        %v1205 = vpack.c.bf16 %v1165, %v1163
        %v1206 = vpack.c.bf16 %v1168, %v1166
        %v1207 = vpack.c.bf16 %v1169, %v1167
        %v1208 = vpack.c.bf16 %v1172, %v1170
        %v1209 = vpack.c.bf16 %v1173, %v1171
        %v1210 = vpack.c.bf16 %v1176, %v1174
        %v1211 = vpack.c.bf16 %v1177, %v1175
        %v1212 = vpack.c.bf16 %v1180, %v1178
        %v1213 = vpack.c.bf16 %v1181, %v1179
        %v1214 = vld [vmem:[%s231] sm:$0xff]
        %v1216 = vcombine.high %v1214, %v1214
        %v1218 = vpack.c.bf16 %v1214, %v1214
        %v1219 = vpack.c.bf16 %v1216, %v1216
        %1220 = vmatprep.subr.bf16.mxu0 %v1183
        %1221 = vmatpush1.bf16.msra.mxu0 %v1182
        %1222 = vmatprep.subr.bf16.mxu0 %v1185
        %1223 = vmatpush1.bf16.msra.mxu0 %v1184
        %1224 = vmatprep.subr.bf16.mxu0 %v1187
        %1225 = vmatpush1.bf16.msra.mxu0 %v1186
        %1226 = vmatprep.subr.bf16.mxu0 %v1189
        %1227 = vmatpush1.bf16.msra.mxu0 %v1188
        %1228 = vmatprep.subr.bf16.mxu0 %v1191
        %1229 = vmatpush1.bf16.msra.mxu0 %v1190
        %1230 = vmatprep.subr.bf16.mxu0 %v1193
        %1231 = vmatpush1.bf16.msra.mxu0 %v1192
        %1232 = vmatprep.subr.bf16.mxu0 %v1195
        %1233 = vmatpush1.bf16.msra.mxu0 %v1194
        %1234 = vmatprep.subr.bf16.mxu0 %v1197
        %1235 = vmatpush1.bf16.msra.mxu0 %v1196
        %1236 = vmatprep.subr.bf16.mxu0 %v1199
        %1237 = vmatpush1.bf16.msra.mxu0 %v1198
        %1238 = vmatprep.subr.bf16.mxu0 %v1201
        %1239 = vmatpush1.bf16.msra.mxu0 %v1200
        %1240 = vmatprep.subr.bf16.mxu0 %v1203
        %1241 = vmatpush1.bf16.msra.mxu0 %v1202
        %1242 = vmatprep.subr.bf16.mxu0 %v1205
        %1243 = vmatpush1.bf16.msra.mxu0 %v1204
        %1244 = vmatprep.subr.bf16.mxu0 %v1207
        %1245 = vmatpush1.bf16.msra.mxu0 %v1206
        %1246 = vmatprep.subr.bf16.mxu0 %v1209
        %1247 = vmatpush1.bf16.msra.mxu0 %v1208
        %1248 = vmatprep.subr.bf16.mxu0 %v1211
        %1249 = vmatpush1.bf16.msra.mxu0 %v1210
        %1250 = vmatprep.subr.bf16.mxu0 %v1213
        %1251 = vmatpush1.bf16.msra.mxu0 %v1212
        %1252 = vmatprep.mubr.bf16.mxu0 %v1219
        %1253 = vmatmul.mubr.bf16.gmra.mrb[0].mxu0 %v1218
        %v1254 = vpop.f32.mrb[0].mxu0
        %v1255 = vadd.f32 0.0, %v1254
        %v1256 = vpop.f32.mrb[0].mxu0
        %v1257 = vadd.f32 0.0, %v1256
        %v1258 = vpop.f32.mrb[0].mxu0
        %v1259 = vpop.f32.mrb[0].mxu0
        %1260 = vdwg.mxu0
        %v1261 = vpack.c.bf16 %v1255, %v1255
        %v1262 = vpack.c.bf16 %v1257, %v1257
        %v1265 = vcombine.low %v1261, %v1262
        %v1267 = vunpack.c.l.s4 1983009808
        %v1268 = vunpack.c.0.s8 %v1267
        %v1269 = vlaneseq
        %v1270 = vshrl.u32 %v1269, 7
        %v1271 = vsub.s32 %v1268, %v1270
        %v1272 = vrot.slane %v1265, %v1271
        %1274 = vst [vmem:[%s281] sm:$0xf] %v1272
        %s1275 = sand.u32 %s127, 1
        %s1276 = scalar_lea.sflag [#allocation4], %s1275
        %s1277 = sand.u32 %s127, 1
        %s1278 = smul.addr %s1277, 4
        %s1279 = scalar_lea.vmem [#allocation8], %s1278
        // Predicated region
        $region45: #{tpu_custom_call.1} parent=31 // pred_check
          %p1280 = pneg %p137
        $region46: #{tpu_custom_call.1} parent=31 // pred_check_branch
          %1282 = sbr.rel (%p1280) target = $region48
        $region47: #{tpu_custom_call.1} parent=31 // pred_region
          %s1283 = smul.u32 2, %s28
          %s1285 = ssub.s32 64, 64
          %1286 = vsyncadd %s1276, %s1285
          %s1287 = smul.addr %s27, 2
          %s1288 = sadd.s32 %s1283, %s1287
          %s1289 = smul.addr %s1288, 32
          %s1290 = scalar_lea.hbm %s3, %s1289
          %s1292 = sshll.u32 %s1279, 4
          %s1293 = int_to_ptr.vmem [resolvable:$true] %s1292
          %1295 = dma.vmem_to_hbm [thread:$0]  %s1293, 64, %s1290, %s1276
        $region48: #{tpu_custom_call.1} parent=31 // pred_fallthru
          _
      $region32: #{tpu_custom_call.1} parent=5 // pred_fallthru
        _
      %p1296 = scmp.le.s32.totalorder 2, %s18
      // Predicated region
      $region49: #{tpu_custom_call.1} parent=5 // pred_check
        %p1297 = pneg %p1296
      $region50: #{tpu_custom_call.1} parent=5 // pred_check_branch
        %1299 = sbr.rel (%p1297) target = $region52
      $region51: #{tpu_custom_call.1} parent=5 // pred_region
        %s1300 = ssub.s32 %s18, 2
        // Predicated region
        $region53: #{tpu_custom_call.1} parent=51 // pred_check
          %p1301 = pneg %p143
        $region54: #{tpu_custom_call.1} parent=51 // pred_check_branch
          %1303 = sbr.rel (%p1301) target = $region56
        $region55: #{tpu_custom_call.1} parent=51 // pred_region
          %s1304 = sand.u32 %s128, 1
          %s1305 = scalar_lea.sflag [#allocation4], %s1304
          %s1306 = sand.u32 %s128, 1
          %s1307 = smul.addr %s1306, 4
          %s1308 = scalar_lea.vmem [#allocation8], %s1307
          %1309 = dma.done %s1305, 64
        $region56: #{tpu_custom_call.1} parent=51 // pred_fallthru
          _
      $region52: #{tpu_custom_call.1} parent=5 // pred_fallthru
        _
    $region6: #{tpu_custom_call.1} parent=1 // loop_footer
      %s22 = sadd.s32 1, %s18
    $region7: #{tpu_custom_call.1} parent=1 // loop_footer_branch
      %17 = sbr.rel target = $region3
    $region8: #{tpu_custom_call.1} parent=1 // loop_exit
      _
    %1310 = vsyncpa [#allocation3], 1
    %s1311 = scalar_lea.sflag [#allocation3], 1
    %1312 = vsyncpa %s1311, 1
    %1313 = vsyncpa [#allocation6], 1
    %s1314 = scalar_lea.sflag [#allocation6], 1
    %1315 = vsyncpa %s1314, 1
    %1316 = vsyncpa [#allocation4], 1
    %s1317 = scalar_lea.sflag [#allocation4], 1
    %1318 = vsyncpa %s1317, 1

</llo_original>
